<compile_context>
chip_gen: v7x
topology: tpu7x:2x2x1
jax: 0.10.0
libtpu: 0.0.40
codegen_flags: <defaults>
</compile_context>

<pallas_src>
import functools

import jax
import jax.numpy as jnp
from jax import lax
from jax.experimental import pallas as pl
from jax.experimental.pallas import tpu as pltpu

# Large finite negative instead of -inf so masked entries never produce NaN.
NEG_INF = -1e30


# ----------------------------------------------------------------------------
# Pass 1: fused QKV projection  x @ [Wq*scale | Wk | Wv]  -> q, k, v
# ----------------------------------------------------------------------------
def _qkv_proj_kernel(x_ref, w_ref, q_ref, k_ref, v_ref, *, H):
    # x_ref: (tm, C), w_ref: (C, 3H); one wide MXU matmul, sliced in-register.
    acc = jnp.dot(x_ref[...], w_ref[...], preferred_element_type=jnp.float32)
    q_ref[...] = acc[:, 0 * H:1 * H].astype(q_ref.dtype)
    k_ref[...] = acc[:, 1 * H:2 * H].astype(k_ref.dtype)
    v_ref[...] = acc[:, 2 * H:3 * H].astype(v_ref.dtype)


def qkv_projection(x, w_qkv, *, tm=256):
    B, T, C = x.shape
    N = w_qkv.shape[1]
    H = N // 3
    tm = min(tm, T)
    assert T % tm == 0, "sequence length must be divisible by the row tile"

    itemsize = jnp.dtype(x.dtype).itemsize
    cost = pl.CostEstimate(
        flops=int(2 * B * T * C * N),
        transcendentals=0,
        bytes_accessed=int((x.size + w_qkv.size + B * T * N) * itemsize),
    )

    out_shape = tuple(
        jax.ShapeDtypeStruct((B, T, H), x.dtype) for _ in range(3)
    )
    out_specs = tuple(
        pl.BlockSpec((pl.Squeezed(), tm, H), lambda b, i: (b, i, 0))
        for _ in range(3)
    )

    return pl.pallas_call(
        functools.partial(_qkv_proj_kernel, H=H),
        out_shape=out_shape,
        grid_spec=pltpu.PrefetchScalarGridSpec(
            num_scalar_prefetch=0,
            grid=(B, T // tm),
            in_specs=[
                pl.BlockSpec((pl.Squeezed(), tm, C), lambda b, i: (b, i, 0)),
                # constant index_map -> fused weight stays VMEM-resident
                pl.BlockSpec((C, N), lambda b, i: (0, 0)),
            ],
            out_specs=out_specs,
        ),
        compiler_params=pltpu.CompilerParams(
            dimension_semantics=("parallel", "parallel"),
        ),
        cost_estimate=cost,
    )(x, w_qkv)


# ----------------------------------------------------------------------------
# Pass 2: flash attention (online softmax, causal)
# ----------------------------------------------------------------------------
def _flash_head_kernel(q_ref, k_ref, v_ref, o_ref, m_sc, l_sc, acc_sc,
                       *, tq, tk):
    qi = pl.program_id(1)
    ki = pl.program_id(2)

    @pl.when(ki == 0)
    def _init():
        m_sc[...] = jnp.full_like(m_sc, NEG_INF)
        l_sc[...] = jnp.zeros_like(l_sc)
        acc_sc[...] = jnp.zeros_like(acc_sc)

    def _scores():
        # Contract head dims directly — no k.T materialization. Scale is
        # already folded into Wq, so q_ref is used as-is.
        return lax.dot_general(
            q_ref[...], k_ref[...],
            dimension_numbers=(((1,), (1,)), ((), ())),
            preferred_element_type=jnp.float32,
        )  # (tq, tk) f32

    def _update(s):
        # Online softmax update (all f32 state).
        m_prev = m_sc[...]
        m_new = jnp.maximum(m_prev, jnp.max(s, axis=-1, keepdims=True))
        alpha = jnp.exp(m_prev - m_new)
        p = jnp.exp(s - m_new)
        l_sc[...] = alpha * l_sc[...] + jnp.sum(p, axis=-1, keepdims=True)
        acc_sc[...] = alpha * acc_sc[...] + jnp.dot(
            p.astype(v_ref.dtype), v_ref[...],
            preferred_element_type=jnp.float32,
        )
        m_sc[...] = m_new

    # Strictly-lower tiles: fully unmasked — no iota / compare / select.
    @pl.when(ki < qi)
    def _off_diag():
        _update(_scores())

    # Diagonal tile: local causal mask (valid because tq == tk), then finalize
    # — the diagonal is the last tile this q block needs.
    @pl.when(ki == qi)
    def _diag():
        s = _scores()
        row = lax.broadcasted_iota(jnp.int32, (tq, tk), 0)
        col = lax.broadcasted_iota(jnp.int32, (tq, tk), 1)
        s = jnp.where(col <= row, s, NEG_INF)
        _update(s)
        # Exact normalization (once per q tile, off the hot loop).
        o_ref[...] = (acc_sc[...] / l_sc[...]).astype(o_ref.dtype)


def flash_head_attention(q, k, v, *, tq=256, tk=256):
    B, T, H = q.shape
    tq = min(tq, T)
    tk = min(tk, T)
    assert tq == tk, "causal tile skipping assumes square tiles"
    assert T % tq == 0, "sequence length must be divisible by the tile size"
    nq, nk = T // tq, T // tk

    itemsize = jnp.dtype(q.dtype).itemsize
    cost = pl.CostEstimate(
        flops=int(2 * B * T * T * H),           # QK^T + PV, halved by causality
        transcendentals=int(B * T * T // 2),
        bytes_accessed=int((q.size + k.size + v.size + B * T * H) * itemsize),
    )

    kernel = functools.partial(_flash_head_kernel, tq=tq, tk=tk)

    return pl.pallas_call(
        kernel,
        out_shape=jax.ShapeDtypeStruct((B, T, H), q.dtype),
        grid_spec=pltpu.PrefetchScalarGridSpec(
            num_scalar_prefetch=0,
            grid=(B, nq, nk),
            in_specs=[
                # q stays resident across the kv loop
                pl.BlockSpec((pl.Squeezed(), tq, H), lambda b, qi, ki: (b, qi, 0)),
                # clamp k/v block index for skipped (ki > qi) tiles:
                # same block index as the previous step -> no redundant DMA.
                pl.BlockSpec((pl.Squeezed(), tk, H),
                             lambda b, qi, ki: (b, jnp.minimum(ki, qi), 0)),
                pl.BlockSpec((pl.Squeezed(), tk, H),
                             lambda b, qi, ki: (b, jnp.minimum(ki, qi), 0)),
            ],
            out_specs=pl.BlockSpec((pl.Squeezed(), tq, H),
                                   lambda b, qi, ki: (b, qi, 0)),
            scratch_shapes=[
                pltpu.VMEM((tq, 1), jnp.float32),   # m (running max)
                pltpu.VMEM((tq, 1), jnp.float32),   # l (running denom)
                pltpu.VMEM((tq, H), jnp.float32),   # acc (unnormalized out)
            ],
        ),
        compiler_params=pltpu.CompilerParams(
            dimension_semantics=("parallel", "parallel", "arbitrary"),
        ),
        cost_estimate=cost,
    )(q, k, v)


# ----------------------------------------------------------------------------
# Head forward = fused QKV projection + flash attention
# ----------------------------------------------------------------------------
def head_forward(x, wq, wk, wv, *, tq=256, tk=256):
    """x: [B, T, C]; wq/wk/wv: [C, H] (already transposed). Returns [B, T, H]."""
    B, T, C = x.shape

    # NOTE: scale is C**-0.5 (n_embd), exactly as in the PyTorch source, and is
    # folded into Wq so the attention kernel never rescales q per kv step.
    scale = C ** -0.5
    w_qkv = jnp.concatenate(
        [wq.astype(jnp.float32) * scale, wk, wv], axis=1
    ).astype(x.dtype)

    q, k, v = qkv_projection(x, w_qkv, tm=min(tq, T))       # each (B, T, H)
    return flash_head_attention(q, k, v, tq=tq, tk=tk)


def reference_head(x, wq, wk, wv):
    """Pure-JAX reference mirroring the PyTorch forward (f32)."""
    B, T, C = x.shape
    q = x @ wq
    k = x @ wk
    v = x @ wv
    wei = jnp.einsum("btd,bsd->bts", q, k) * (C ** -0.5)
    mask = jnp.tril(jnp.ones((T, T), dtype=bool))
    wei = jnp.where(mask, wei, -jnp.inf)
    wei = jax.nn.softmax(wei, axis=-1)
    return jnp.einsum("bts,bsd->btd", wei, v)


if __name__ == "__main__":
    # Shapes consistent with the GPT spec: block_size=256, n_embd=384,
    # head_size = n_embd // n_head = 64.
    B = 2
    T = 256
    n_embd = 384
    n_head = 6
    head_size = n_embd // n_head      # 64

    key = jax.random.PRNGKey(0)
    kx, kq, kk, kv = jax.random.split(key, 4)

    x = jax.random.normal(kx, (B, T, n_embd), dtype=jnp.float32)

    # nn.Linear(n_embd, head_size, bias=False) weight is (head_size, n_embd);
    # we store the transpose (n_embd, head_size) so the kernel does x @ W.
    init_scale = 1.0 / jnp.sqrt(jnp.float32(n_embd))
    wq = (jax.random.uniform(kq, (n_embd, head_size), jnp.float32) * 2 - 1) * init_scale
    wk = (jax.random.uniform(kk, (n_embd, head_size), jnp.float32) * 2 - 1) * init_scale
    wv = (jax.random.uniform(kv, (n_embd, head_size), jnp.float32) * 2 - 1) * init_scale

    ref = reference_head(x, wq, wk, wv)

    # f32 path: tight correctness check (exact normalization, single kv tile).
    out_f32 = jax.block_until_ready(head_forward(x, wq, wk, wv))
    assert out_f32.shape == (B, T, head_size)
    assert jnp.allclose(out_f32, ref, atol=1e-4, rtol=1e-4), (
        "f32 mismatch vs reference, max abs diff = %e"
        % float(jnp.max(jnp.abs(out_f32 - ref)))
    )

    # bf16 path (the performance path on v6e/v7x): matmuls in bf16 with f32
    # accumulation, softmax state in f32.
    out_bf16 = jax.block_until_ready(
        head_forward(x.astype(jnp.bfloat16),
                     wq.astype(jnp.bfloat16),
                     wk.astype(jnp.bfloat16),
                     wv.astype(jnp.bfloat16))
    )
    assert out_bf16.shape == (B, T, head_size)
    assert jnp.allclose(out_bf16.astype(jnp.float32), ref, atol=5e-2, rtol=5e-2), (
        "bf16 mismatch vs reference, max abs diff = %e"
        % float(jnp.max(jnp.abs(out_bf16.astype(jnp.float32) - ref)))
    )

    print("KERNEL_OK")
</pallas_src>

<mosaic_0001>
module attributes {stable_mosaic.version = 11 : i64} {
  func.func @_qkv_proj_kernel(%arg0: i32, %arg1: i32, %arg2: memref<1x256x384xf32, #tpu.memory_space<vmem>>, %arg3: memref<384x192xf32, #tpu.memory_space<vmem>>, %arg4: memref<1x256x64xf32, #tpu.memory_space<vmem>>, %arg5: memref<1x256x64xf32, #tpu.memory_space<vmem>>, %arg6: memref<1x256x64xf32, #tpu.memory_space<vmem>>) attributes {dimension_semantics = [#tpu.dimension_semantics<parallel>, #tpu.dimension_semantics<parallel>], iteration_bounds = array<i64: 2, 1>, scalar_prefetch = 0 : i64, scratch_operands = 0 : i64, tpu.core_type = #tpu.core_type<tc>, window_params = [{transform_indices = @transform_0, window_bounds = array<i64: 1, 256, 384>}, {pipeline_mode = #tpu.pipeline_mode<synchronous>, transform_indices = @transform_1, window_bounds = array<i64: 384, 192>}, {transform_indices = @transform_2, window_bounds = array<i64: 1, 256, 64>}, {transform_indices = @transform_3, window_bounds = array<i64: 1, 256, 64>}, {transform_indices = @transform_4, window_bounds = array<i64: 1, 256, 64>}]} {
    %c0 = arith.constant 0 : index
    %c0_0 = arith.constant 0 : index
    %c0_1 = arith.constant 0 : index
    %0 = vector.load %arg2[%c0, %c0_0, %c0_1] : memref<1x256x384xf32, #tpu.memory_space<vmem>>, vector<1x256x384xf32>
    %1 = vector.shape_cast %0 : vector<1x256x384xf32> to vector<256x384xf32>
    %c0_2 = arith.constant 0 : index
    %c0_3 = arith.constant 0 : index
    %2 = vector.load %arg3[%c0_2, %c0_3] : memref<384x192xf32, #tpu.memory_space<vmem>>, vector<384x192xf32>
    %cst = arith.constant dense<0.000000e+00> : vector<256x192xf32>
    %3 = tpu.matmul %1, %2, %cst {dimension_numbers = #tpu.dot_dimension_numbers<[1], [0], [0], [1], [0, 0, 1, 1], [], []>} : vector<256x384xf32>, vector<384x192xf32>, vector<256x192xf32> -> vector<256x192xf32>
    %4 = vector.extract_strided_slice %3 {offsets = [0, 0], sizes = [256, 64], strides = [1, 1]} : vector<256x192xf32> to vector<256x64xf32>
    %c0_4 = arith.constant 0 : index
    %c0_5 = arith.constant 0 : index
    %c0_6 = arith.constant 0 : index
    %5 = vector.load %arg4[%c0_4, %c0_5, %c0_6] : memref<1x256x64xf32, #tpu.memory_space<vmem>>, vector<1x256x64xf32>
    %6 = vector.shape_cast %5 : vector<1x256x64xf32> to vector<256x64xf32>
    %7 = vector.shape_cast %4 : vector<256x64xf32> to vector<1x256x64xf32>
    tpu.vector_store %arg4[%c0_4, %c0_5, %c0_6], %7 {strides = array<i32>} : memref<1x256x64xf32, #tpu.memory_space<vmem>>, vector<1x256x64xf32>,
    %8 = vector.extract_strided_slice %3 {offsets = [0, 64], sizes = [256, 64], strides = [1, 1]} : vector<256x192xf32> to vector<256x64xf32>
    %c0_7 = arith.constant 0 : index
    %c0_8 = arith.constant 0 : index
    %c0_9 = arith.constant 0 : index
    %9 = vector.load %arg5[%c0_7, %c0_8, %c0_9] : memref<1x256x64xf32, #tpu.memory_space<vmem>>, vector<1x256x64xf32>
    %10 = vector.shape_cast %9 : vector<1x256x64xf32> to vector<256x64xf32>
    %11 = vector.shape_cast %8 : vector<256x64xf32> to vector<1x256x64xf32>
    tpu.vector_store %arg5[%c0_7, %c0_8, %c0_9], %11 {strides = array<i32>} : memref<1x256x64xf32, #tpu.memory_space<vmem>>, vector<1x256x64xf32>,
    %12 = vector.extract_strided_slice %3 {offsets = [0, 128], sizes = [256, 64], strides = [1, 1]} : vector<256x192xf32> to vector<256x64xf32>
    %c0_10 = arith.constant 0 : index
    %c0_11 = arith.constant 0 : index
    %c0_12 = arith.constant 0 : index
    %13 = vector.load %arg6[%c0_10, %c0_11, %c0_12] : memref<1x256x64xf32, #tpu.memory_space<vmem>>, vector<1x256x64xf32>
    %14 = vector.shape_cast %13 : vector<1x256x64xf32> to vector<256x64xf32>
    %15 = vector.shape_cast %12 : vector<256x64xf32> to vector<1x256x64xf32>
    tpu.vector_store %arg6[%c0_10, %c0_11, %c0_12], %15 {strides = array<i32>} : memref<1x256x64xf32, #tpu.memory_space<vmem>>, vector<1x256x64xf32>,
    return
  }
  func.func @transform_0(%arg0: i32, %arg1: i32) -> (i32, i32, i32) {
    %c0_i32 = arith.constant 0 : i32
    %c0_i32_0 = arith.constant 0 : i32
    return %arg0, %arg1, %c0_i32 : i32, i32, i32
  }
  func.func @transform_1(%arg0: i32, %arg1: i32) -> (i32, i32) {
    %c0_i32 = arith.constant 0 : i32
    %c0_i32_0 = arith.constant 0 : i32
    %c0_i32_1 = arith.constant 0 : i32
    return %c0_i32, %c0_i32_0 : i32, i32
  }
  func.func @transform_2(%arg0: i32, %arg1: i32) -> (i32, i32, i32) {
    %c0_i32 = arith.constant 0 : i32
    %c0_i32_0 = arith.constant 0 : i32
    return %arg0, %arg1, %c0_i32 : i32, i32, i32
  }
  func.func @transform_3(%arg0: i32, %arg1: i32) -> (i32, i32, i32) {
    %c0_i32 = arith.constant 0 : i32
    %c0_i32_0 = arith.constant 0 : i32
    return %arg0, %arg1, %c0_i32 : i32, i32, i32
  }
  func.func @transform_4(%arg0: i32, %arg1: i32) -> (i32, i32, i32) {
    %c0_i32 = arith.constant 0 : i32
    %c0_i32_0 = arith.constant 0 : i32
    return %arg0, %arg1, %c0_i32 : i32, i32, i32
  }
}

</mosaic_0001>

<llo_original>
// kernel: tpu_custom_call.1
$region0: #{tpu_custom_call.1}
  #allocation0 [shape = 'u32[]', space=smem, size = 0x4, offset = 0x4, fixed_abs, tag = 'smem constant byte address 0x4 - core index']
  #allocation1 [shape = 'u32[144,128]{1,0:T(1,128)}', space=vmem, size = 0x12000, scoped, tag = 'internal scratch']
  %s0 = inlined_call_operand.hbm [shape: f32[2,256,384], index: 0, kind: input, shape index: {}]
  %s1 = inlined_call_operand.vmem [shape: f32[384,192], index: 1, kind: input, shape index: {}]
  %s2 = inlined_call_operand.vmem [shape: f32[2,256,64], index: 2, kind: output, shape index: {0}]
  %s3 = inlined_call_operand.vmem [shape: f32[2,256,64], index: 3, kind: output, shape index: {1}]
  %s4 = inlined_call_operand.vmem [shape: f32[2,256,64], index: 4, kind: output, shape index: {2}]
  %5 = xla_tuple %s2, %s3, %s4
  %s6 = sld [smem:[#allocation0]]
  $region61: #{tpu_custom_call.1} parent=0
    _
  %s8 = ssub.s32 1, %s6
  %s9 = scalar_select 0, %s8, %s6
  $region1: #{tpu_custom_call.1} parent=0
    #allocation2 [shape = 'u8[786432]{0}', space=vmem, size = 0xc0000, scoped, tag = 'input window, operand 0']
    #allocation3 [shape = 's32[2]{0}', space=sflag, size = 0x8, scoped, tag = 'scoped memory for tpu_custom_call.1']
    %10 = vsyncpa [#allocation3], 0
    %s11 = scalar_lea.sflag [#allocation3], 1
    %12 = vsyncpa %s11, 0
    loop: start=0, step=1, limit=4
    $region2: #{tpu_custom_call.1} parent=1 // loop_pre_header
      _
    $region3: #{tpu_custom_call.1} parent=1 // loop_header
      %s14 = sphi 0, %s18
      %p15 = scmp.ge.s32.totalorder %s14, 4
      %s21 = sphi 0, %s33
      %s22 = sphi 0, %s29
      %s23 = sphi 0, %s21
      %s24 = sphi 0, %s22
      %s25 = sphi 0, %s23
      %s26 = sphi 0, %s24
      %s38 = sphi 0, %s40
      %s41 = sphi 0, %s38
      %s42 = sphi 0, %s41
      %s58 = sphi 0, %s42
      %s62 = sphi 0, %s62
      %s64 = sphi 0, %s62
      %s65 = sphi 0, %s64
      %s79 = sphi 0, %s65
      %s87 = sphi 0, %s89
      %s90 = sphi 0, %s87
      %s91 = sphi 0, %s90
      %s107 = sphi 0, %s91
      %s115 = sphi 0, %s117
      %s118 = sphi 0, %s115
      %s119 = sphi 0, %s118
      %s135 = sphi 0, %s119
      %s143 = sphi 0, %s145
      %s146 = sphi 0, %s143
      %s147 = sphi 0, %s146
      %s163 = sphi 0, %s147
    $region4: #{tpu_custom_call.1} parent=1 // loop_header_branch
      %17 = sbr.rel (%p15) target = $region8
    $region5: #{tpu_custom_call.1} parent=1 // loop_body
      %s19 = ssub.s32 %s14, 1
      %s20 = ssub.s32 %s14, 2
      %s27 = sadd.s32 1, %s22
      %p28 = scmp.ge.s32.totalorder %s27, 1
      %s29 = scalar_select %p28, 0, %s27
      %s30 = sadd.s32 1, %s21
      %s31 = scalar_select %p28, %s30, %s21
      %p32 = scmp.ge.s32.totalorder %s31, 2
      %s33 = scalar_select %p32, 0, %s31
      %s34 = ssub.s32 %s21, %s33
      %s35 = ssub.s32 %s22, %s29
      %s36 = sor.u32 %s34, %s35
      %p37 = scmp.eq.s32.totalorder %s36, 0
      %s39 = sadd.s32 %s38, 1
      %s40 = scalar_select %p37, %s38, %s39
      %p43 = pneg %p37
      %p44 = scmp.eq.s32.totalorder %s14, 1
      %p45 = por %p43, %p44
      %p46 = scmp.ne.s32.totalorder %s38, %s41
      %p47 = scmp.eq.s32.totalorder %s14, 0
      %p48 = por %p46, %p47
      %p49 = scmp.ne.s32.totalorder %s38, %s41
      %p50 = scmp.eq.s32.totalorder %s19, 1
      %p51 = por %p49, %p50
      %p52 = scmp.ne.s32.totalorder %s41, %s42
      %p53 = scmp.eq.s32.totalorder %s19, 0
      %p54 = por %p52, %p53
      %p55 = scmp.ne.s32.totalorder %s41, %s42
      %p56 = scmp.eq.s32.totalorder %s20, 1
      %p57 = por %p55, %p56
      %p59 = scmp.ne.s32.totalorder %s42, %s58
      %p60 = scmp.eq.s32.totalorder %s20, 0
      %p61 = por %p59, %p60
      %s63 = sadd.s32 %s62, 1
      %p66 = scmp.eq.s32.totalorder %s14, 1
      %p67 = scmp.ne.s32.totalorder %s62, %s64
      %p68 = scmp.eq.s32.totalorder %s14, 0
      %p69 = por %p67, %p68
      %p70 = scmp.ne.s32.totalorder %s62, %s64
      %p71 = scmp.eq.s32.totalorder %s19, 1
      %p72 = por %p70, %p71
      %p73 = scmp.ne.s32.totalorder %s64, %s65
      %p74 = scmp.eq.s32.totalorder %s19, 0
      %p75 = por %p73, %p74
      %p76 = scmp.ne.s32.totalorder %s64, %s65
      %p77 = scmp.eq.s32.totalorder %s20, 1
      %p78 = por %p76, %p77
      %p80 = scmp.ne.s32.totalorder %s65, %s79
      %p81 = scmp.eq.s32.totalorder %s20, 0
      %p82 = por %p80, %p81
      %s83 = ssub.s32 %s21, %s33
      %s84 = ssub.s32 %s22, %s29
      %s85 = sor.u32 %s83, %s84
      %p86 = scmp.eq.s32.totalorder %s85, 0
      %s88 = sadd.s32 %s87, 1
      %s89 = scalar_select %p86, %s87, %s88
      %p92 = pneg %p86
      %p93 = scmp.eq.s32.totalorder %s14, 1
      %p94 = por %p92, %p93
      %p95 = scmp.ne.s32.totalorder %s87, %s90
      %p96 = scmp.eq.s32.totalorder %s14, 0
      %p97 = por %p95, %p96
      %p98 = scmp.ne.s32.totalorder %s87, %s90
      %p99 = scmp.eq.s32.totalorder %s19, 1
      %p100 = por %p98, %p99
      %p101 = scmp.ne.s32.totalorder %s90, %s91
      %p102 = scmp.eq.s32.totalorder %s19, 0
      %p103 = por %p101, %p102
      %p104 = scmp.ne.s32.totalorder %s90, %s91
      %p105 = scmp.eq.s32.totalorder %s20, 1
      %p106 = por %p104, %p105
      %p108 = scmp.ne.s32.totalorder %s91, %s107
      %p109 = scmp.eq.s32.totalorder %s20, 0
      %p110 = por %p108, %p109
      %s111 = ssub.s32 %s21, %s33
      %s112 = ssub.s32 %s22, %s29
      %s113 = sor.u32 %s111, %s112
      %p114 = scmp.eq.s32.totalorder %s113, 0
      %s116 = sadd.s32 %s115, 1
      %s117 = scalar_select %p114, %s115, %s116
      %p120 = pneg %p114
      %p121 = scmp.eq.s32.totalorder %s14, 1
      %p122 = por %p120, %p121
      %p123 = scmp.ne.s32.totalorder %s115, %s118
      %p124 = scmp.eq.s32.totalorder %s14, 0
      %p125 = por %p123, %p124
      %p126 = scmp.ne.s32.totalorder %s115, %s118
      %p127 = scmp.eq.s32.totalorder %s19, 1
      %p128 = por %p126, %p127
      %p129 = scmp.ne.s32.totalorder %s118, %s119
      %p130 = scmp.eq.s32.totalorder %s19, 0
      %p131 = por %p129, %p130
      %p132 = scmp.ne.s32.totalorder %s118, %s119
      %p133 = scmp.eq.s32.totalorder %s20, 1
      %p134 = por %p132, %p133
      %p136 = scmp.ne.s32.totalorder %s119, %s135
      %p137 = scmp.eq.s32.totalorder %s20, 0
      %p138 = por %p136, %p137
      %s139 = ssub.s32 %s21, %s33
      %s140 = ssub.s32 %s22, %s29
      %s141 = sor.u32 %s139, %s140
      %p142 = scmp.eq.s32.totalorder %s141, 0
      %s144 = sadd.s32 %s143, 1
      %s145 = scalar_select %p142, %s143, %s144
      %p148 = pneg %p142
      %p149 = scmp.eq.s32.totalorder %s14, 1
      %p150 = por %p148, %p149
      %p151 = scmp.ne.s32.totalorder %s143, %s146
      %p152 = scmp.eq.s32.totalorder %s14, 0
      %p153 = por %p151, %p152
      %p154 = scmp.ne.s32.totalorder %s143, %s146
      %p155 = scmp.eq.s32.totalorder %s19, 1
      %p156 = por %p154, %p155
      %p157 = scmp.ne.s32.totalorder %s146, %s147
      %p158 = scmp.eq.s32.totalorder %s19, 0
      %p159 = por %p157, %p158
      %p160 = scmp.ne.s32.totalorder %s146, %s147
      %p161 = scmp.eq.s32.totalorder %s20, 1
      %p162 = por %p160, %p161
      %p164 = scmp.ne.s32.totalorder %s147, %s163
      %p165 = scmp.eq.s32.totalorder %s20, 0
      %p166 = por %p164, %p165
      %p167 = scmp.le.s32.totalorder 1, %s14
      %p168 = scmp.lt.s32.totalorder %s14, 3
      %p169 = pnand %p167, %p168
      %p170 = pneg %p169
      // Predicated region
      $region9: #{tpu_custom_call.1} parent=5 // pred_check
        _
      $region10: #{tpu_custom_call.1} parent=5 // pred_check_branch
        %172 = sbr.rel (%p169) target = $region12
      $region11: #{tpu_custom_call.1} parent=5 // pred_region
        %s173 = ssub.s32 %s14, 1
        // Predicated region
        $region13: #{tpu_custom_call.1} parent=11 // pred_check
          %p174 = pneg %p75
        $region14: #{tpu_custom_call.1} parent=11 // pred_check_branch
          %176 = sbr.rel (%p174) target = $region16
        $region15: #{tpu_custom_call.1} parent=11 // pred_region
          _
        $region16: #{tpu_custom_call.1} parent=11 // pred_fallthru
          _
      $region12: #{tpu_custom_call.1} parent=5 // pred_fallthru
        _
      %p177 = scmp.lt.s32.totalorder %s14, 2
      // Predicated region
      $region17: #{tpu_custom_call.1} parent=5 // pred_check
        %p178 = pneg %p177
      $region18: #{tpu_custom_call.1} parent=5 // pred_check_branch
        %180 = sbr.rel (%p178) target = $region20
      $region19: #{tpu_custom_call.1} parent=5 // pred_region
        // Predicated region
        $region21: #{tpu_custom_call.1} parent=19 // pred_check
          %p181 = pneg %p48
        $region22: #{tpu_custom_call.1} parent=19 // pred_check_branch
          %183 = sbr.rel (%p181) target = $region24
        $region23: #{tpu_custom_call.1} parent=19 // pred_region
          %s184 = sand.u32 %s38, 1
          %s185 = scalar_lea.sflag [#allocation3], %s184
          %s186 = sand.u32 %s38, 1
          %s187 = smul.addr %s186, 768
          %s188 = scalar_lea.vmem [#allocation2], %s187
          %s189 = smul.u32 32, %s22
          %s191 = ssub.s32 12288, 12288
          %192 = vsyncadd %s185, %s191
          %s193 = smul.addr %s189, 3
          %s194 = smul.addr %s21, 96
          %s195 = sadd.s32 %s193, %s194
          %s196 = smul.addr %s195, 128
          %s197 = scalar_lea.hbm %s0, %s196
          %s198 = sshll.u32 %s188, 4
          %s199 = int_to_ptr.vmem [resolvable:$true] %s198
          %204 = dma.hbm_to_vmem [thread:$0]  %s197, 12288, %s199, %s185, 384, 384, 24
        $region24: #{tpu_custom_call.1} parent=19 // pred_fallthru
          _
      $region20: #{tpu_custom_call.1} parent=5 // pred_fallthru
        _
      %p205 = scmp.le.s32.totalorder 1, %s14
      %p206 = scmp.lt.s32.totalorder %s14, 3
      %p207 = pnand %p205, %p206
      %p208 = pneg %p207
      // Predicated region
      $region25: #{tpu_custom_call.1} parent=5 // pred_check
        _
      $region26: #{tpu_custom_call.1} parent=5 // pred_check_branch
        %210 = sbr.rel (%p207) target = $region28
      $region27: #{tpu_custom_call.1} parent=5 // pred_region
        %s211 = ssub.s32 %s14, 1
        %s212 = sand.u32 %s41, 1
        %s213 = scalar_lea.sflag [#allocation3], %s212
        %s214 = sand.u32 %s41, 1
        %s215 = smul.addr %s214, 768
        %s216 = scalar_lea.vmem [#allocation2], %s215
        // Predicated region
        $region29: #{tpu_custom_call.1} parent=27 // pred_check
          %p217 = pneg %p54
        $region30: #{tpu_custom_call.1} parent=27 // pred_check_branch
          %219 = sbr.rel (%p217) target = $region32
        $region31: #{tpu_custom_call.1} parent=27 // pred_region
          %220 = dma.done %s213, 12288
        $region32: #{tpu_custom_call.1} parent=27 // pred_fallthru
          _
        %s221 = sand.u32 %s41, 1
        %s222 = scalar_lea.sflag [#allocation3], %s221
        %s223 = sand.u32 %s41, 1
        %s224 = smul.addr %s223, 768
        %s225 = scalar_lea.vmem [#allocation2], %s224
        %p226 = pneg %p54
        %p227 = pneg %p51
        %p228 = pneg %p75
        %p229 = pneg %p72
        %p230 = pneg %p103
        %p231 = pneg %p100
        %s232 = smul.u32 32, %s24
        %p233 = scmp.lt.s32.totalorder %s23, 1
        %s234 = scalar_select %p233, %s23, 1
        %p235 = scmp.lt.s32.totalorder %s232, 31
        %s236 = scalar_select %p235, %s232, 31
        %s237 = smul.addr %s234, 32
        %s238 = sadd.s32 %s236, %s237
        %s239 = smul.addr %s238, 8
        %s240 = scalar_lea.vmem %s2, %s239
        %p241 = pneg %p131
        %p242 = pneg %p128
        %s243 = smul.u32 32, %s24
        %p244 = scmp.lt.s32.totalorder %s23, 1
        %s245 = scalar_select %p244, %s23, 1
        %p246 = scmp.lt.s32.totalorder %s243, 31
        %s247 = scalar_select %p246, %s243, 31
        %s248 = smul.addr %s245, 32
        %s249 = sadd.s32 %s247, %s248
        %s250 = smul.addr %s249, 8
        %s251 = scalar_lea.vmem %s3, %s250
        %p252 = pneg %p159
        %p253 = pneg %p156
        %s254 = smul.u32 32, %s24
        %p255 = scmp.lt.s32.totalorder %s23, 1
        %s256 = scalar_select %p255, %s23, 1
        %p257 = scmp.lt.s32.totalorder %s254, 31
        %s258 = scalar_select %p257, %s254, 31
        %s259 = smul.addr %s256, 32
        %s260 = sadd.s32 %s258, %s259
        %s261 = smul.addr %s260, 8
        %s262 = scalar_lea.vmem %s4, %s261
        %s263 = smul.u32 32, %s24
        %s264 = smul.u32 32, %s24
        %p265 = scmp.lt.s32.totalorder %s23, 1
        %s266 = scalar_select %p265, %s23, 1
        %p267 = scmp.lt.s32.totalorder %s264, 31
        %s268 = scalar_select %p267, %s264, 31
        %s269 = smul.addr %s266, 32
        %s270 = sadd.s32 %s268, %s269
        %s271 = smul.addr %s270, 8
        %s272 = scalar_lea.vmem %s2, %s271
        %s273 = smul.u32 32, %s24
        %s274 = smul.u32 32, %s24
        %p275 = scmp.lt.s32.totalorder %s23, 1
        %s276 = scalar_select %p275, %s23, 1
        %p277 = scmp.lt.s32.totalorder %s274, 31
        %s278 = scalar_select %p277, %s274, 31
        %s279 = smul.addr %s276, 32
        %s280 = sadd.s32 %s278, %s279
        %s281 = smul.addr %s280, 8
        %s282 = scalar_lea.vmem %s3, %s281
        %s283 = smul.u32 32, %s24
        %s284 = smul.u32 32, %s24
        %p285 = scmp.lt.s32.totalorder %s23, 1
        %s286 = scalar_select %p285, %s23, 1
        %p287 = scmp.lt.s32.totalorder %s284, 31
        %s288 = scalar_select %p287, %s284, 31
        %s289 = smul.addr %s286, 32
        %s290 = sadd.s32 %s288, %s289
        %s291 = smul.addr %s290, 8
        %s292 = scalar_lea.vmem %s4, %s291
        %s293 = smul.u32 32, %s24
        %v294 = vld [vmem:[%s216] sm:$0xff]
        %v295 = vld [vmem:[%s216 + $0x8] sm:$0xff]
        %v296 = vld [vmem:[%s216 + $0x10] sm:$0xff]
        %v297 = vld [vmem:[%s216 + $0x18] sm:$0xff]
        %v298 = vld [vmem:[%s216 + $0x20] sm:$0xff]
        %v299 = vld [vmem:[%s216 + $0x28] sm:$0xff]
        %v300 = vld [vmem:[%s216 + $0x30] sm:$0xff]
        %v301 = vld [vmem:[%s216 + $0x38] sm:$0xff]
        %v302 = vld [vmem:[%s216 + $0x40] sm:$0xff]
        %v303 = vld [vmem:[%s216 + $0x48] sm:$0xff]
        %v304 = vld [vmem:[%s216 + $0x50] sm:$0xff]
        %v305 = vld [vmem:[%s216 + $0x58] sm:$0xff]
        %v306 = vld [vmem:[%s216 + $0x60] sm:$0xff]
        %v307 = vld [vmem:[%s216 + $0x68] sm:$0xff]
        %v308 = vld [vmem:[%s216 + $0x70] sm:$0xff]
        %v309 = vld [vmem:[%s216 + $0x78] sm:$0xff]
        %v310 = vld [vmem:[%s216 + $0x80] sm:$0xff]
        %v311 = vld [vmem:[%s216 + $0x88] sm:$0xff]
        %v312 = vld [vmem:[%s216 + $0x90] sm:$0xff]
        %v313 = vld [vmem:[%s216 + $0x98] sm:$0xff]
        %v314 = vld [vmem:[%s216 + $0xa0] sm:$0xff]
        %v315 = vld [vmem:[%s216 + $0xa8] sm:$0xff]
        %v316 = vld [vmem:[%s216 + $0xb0] sm:$0xff]
        %v317 = vld [vmem:[%s216 + $0xb8] sm:$0xff]
        %v318 = vld [vmem:[%s216 + $0xc0] sm:$0xff]
        %v319 = vld [vmem:[%s216 + $0xc8] sm:$0xff]
        %v320 = vld [vmem:[%s216 + $0xd0] sm:$0xff]
        %v321 = vld [vmem:[%s216 + $0xd8] sm:$0xff]
        %v322 = vld [vmem:[%s216 + $0xe0] sm:$0xff]
        %v323 = vld [vmem:[%s216 + $0xe8] sm:$0xff]
        %v324 = vld [vmem:[%s216 + $0xf0] sm:$0xff]
        %v325 = vld [vmem:[%s216 + $0xf8] sm:$0xff]
        %v326 = vld [vmem:[%s216 + $0x100] sm:$0xff]
        %v327 = vld [vmem:[%s216 + $0x108] sm:$0xff]
        %v328 = vld [vmem:[%s216 + $0x110] sm:$0xff]
        %v329 = vld [vmem:[%s216 + $0x118] sm:$0xff]
        %v330 = vld [vmem:[%s216 + $0x120] sm:$0xff]
        %v331 = vld [vmem:[%s216 + $0x128] sm:$0xff]
        %v332 = vld [vmem:[%s216 + $0x130] sm:$0xff]
        %v333 = vld [vmem:[%s216 + $0x138] sm:$0xff]
        %v334 = vld [vmem:[%s216 + $0x140] sm:$0xff]
        %v335 = vld [vmem:[%s216 + $0x148] sm:$0xff]
        %v336 = vld [vmem:[%s216 + $0x150] sm:$0xff]
        %v337 = vld [vmem:[%s216 + $0x158] sm:$0xff]
        %v338 = vld [vmem:[%s216 + $0x160] sm:$0xff]
        %v339 = vld [vmem:[%s216 + $0x168] sm:$0xff]
        %v340 = vld [vmem:[%s216 + $0x170] sm:$0xff]
        %v341 = vld [vmem:[%s216 + $0x178] sm:$0xff]
        %v342 = vld [vmem:[%s216 + $0x180] sm:$0xff]
        %v343 = vld [vmem:[%s216 + $0x188] sm:$0xff]
        %v344 = vld [vmem:[%s216 + $0x190] sm:$0xff]
        %v345 = vld [vmem:[%s216 + $0x198] sm:$0xff]
        %v346 = vld [vmem:[%s216 + $0x1a0] sm:$0xff]
        %v347 = vld [vmem:[%s216 + $0x1a8] sm:$0xff]
        %v348 = vld [vmem:[%s216 + $0x1b0] sm:$0xff]
        %v349 = vld [vmem:[%s216 + $0x1b8] sm:$0xff]
        %v350 = vld [vmem:[%s216 + $0x1c0] sm:$0xff]
        %v351 = vld [vmem:[%s216 + $0x1c8] sm:$0xff]
        %v352 = vld [vmem:[%s216 + $0x1d0] sm:$0xff]
        %v353 = vld [vmem:[%s216 + $0x1d8] sm:$0xff]
        %v354 = vld [vmem:[%s216 + $0x1e0] sm:$0xff]
        %v355 = vld [vmem:[%s216 + $0x1e8] sm:$0xff]
        %v356 = vld [vmem:[%s216 + $0x1f0] sm:$0xff]
        %v357 = vld [vmem:[%s216 + $0x1f8] sm:$0xff]
        %v358 = vld [vmem:[%s216 + $0x200] sm:$0xff]
        %v359 = vld [vmem:[%s216 + $0x208] sm:$0xff]
        %v360 = vld [vmem:[%s216 + $0x210] sm:$0xff]
        %v361 = vld [vmem:[%s216 + $0x218] sm:$0xff]
        %v362 = vld [vmem:[%s216 + $0x220] sm:$0xff]
        %v363 = vld [vmem:[%s216 + $0x228] sm:$0xff]
        %v364 = vld [vmem:[%s216 + $0x230] sm:$0xff]
        %v365 = vld [vmem:[%s216 + $0x238] sm:$0xff]
        %v366 = vld [vmem:[%s216 + $0x240] sm:$0xff]
        %v367 = vld [vmem:[%s216 + $0x248] sm:$0xff]
        %v368 = vld [vmem:[%s216 + $0x250] sm:$0xff]
        %v369 = vld [vmem:[%s216 + $0x258] sm:$0xff]
        %v370 = vld [vmem:[%s216 + $0x260] sm:$0xff]
        %v371 = vld [vmem:[%s216 + $0x268] sm:$0xff]
        %v372 = vld [vmem:[%s216 + $0x270] sm:$0xff]
        %v373 = vld [vmem:[%s216 + $0x278] sm:$0xff]
        %v374 = vld [vmem:[%s216 + $0x280] sm:$0xff]
        %v375 = vld [vmem:[%s216 + $0x288] sm:$0xff]
        %v376 = vld [vmem:[%s216 + $0x290] sm:$0xff]
        %v377 = vld [vmem:[%s216 + $0x298] sm:$0xff]
        %v378 = vld [vmem:[%s216 + $0x2a0] sm:$0xff]
        %v379 = vld [vmem:[%s216 + $0x2a8] sm:$0xff]
        %v380 = vld [vmem:[%s216 + $0x2b0] sm:$0xff]
        %v381 = vld [vmem:[%s216 + $0x2b8] sm:$0xff]
        %v382 = vld [vmem:[%s216 + $0x2c0] sm:$0xff]
        %v383 = vld [vmem:[%s216 + $0x2c8] sm:$0xff]
        %v384 = vld [vmem:[%s216 + $0x2d0] sm:$0xff]
        %v385 = vld [vmem:[%s216 + $0x2d8] sm:$0xff]
        %v386 = vld [vmem:[%s216 + $0x2e0] sm:$0xff]
        %v387 = vld [vmem:[%s216 + $0x2e8] sm:$0xff]
        %v388 = vld [vmem:[%s216 + $0x2f0] sm:$0xff]
        %v389 = vld [vmem:[%s216 + $0x2f8] sm:$0xff]
        %v390 = vld [vmem:[%s1] sm:$0xff]
        %v391 = vld [vmem:[%s1 + $0x8] sm:$0xff]
        %v392 = vld [vmem:[%s1 + $0x10] sm:$0xff]
        %v393 = vld [vmem:[%s1 + $0x18] sm:$0xff]
        %v394 = vld [vmem:[%s1 + $0x20] sm:$0xff]
        %v395 = vld [vmem:[%s1 + $0x28] sm:$0xff]
        %v396 = vld [vmem:[%s1 + $0x30] sm:$0xff]
        %v397 = vld [vmem:[%s1 + $0x38] sm:$0xff]
        %v398 = vld [vmem:[%s1 + $0x40] sm:$0xff]
        %v399 = vld [vmem:[%s1 + $0x48] sm:$0xff]
        %v400 = vld [vmem:[%s1 + $0x50] sm:$0xff]
        %v401 = vld [vmem:[%s1 + $0x58] sm:$0xff]
        %v402 = vld [vmem:[%s1 + $0x60] sm:$0xff]
        %v403 = vld [vmem:[%s1 + $0x68] sm:$0xff]
        %v404 = vld [vmem:[%s1 + $0x70] sm:$0xff]
        %v405 = vld [vmem:[%s1 + $0x78] sm:$0xff]
        %v406 = vld [vmem:[%s1 + $0x80] sm:$0xff]
        %v407 = vld [vmem:[%s1 + $0x88] sm:$0xff]
        %v408 = vld [vmem:[%s1 + $0x90] sm:$0xff]
        %v409 = vld [vmem:[%s1 + $0x98] sm:$0xff]
        %v410 = vld [vmem:[%s1 + $0xa0] sm:$0xff]
        %v411 = vld [vmem:[%s1 + $0xa8] sm:$0xff]
        %v412 = vld [vmem:[%s1 + $0xb0] sm:$0xff]
        %v413 = vld [vmem:[%s1 + $0xb8] sm:$0xff]
        %v414 = vld [vmem:[%s1 + $0xc0] sm:$0xff]
        %v415 = vld [vmem:[%s1 + $0xc8] sm:$0xff]
        %v416 = vld [vmem:[%s1 + $0xd0] sm:$0xff]
        %v417 = vld [vmem:[%s1 + $0xd8] sm:$0xff]
        %v418 = vld [vmem:[%s1 + $0xe0] sm:$0xff]
        %v419 = vld [vmem:[%s1 + $0xe8] sm:$0xff]
        %v420 = vld [vmem:[%s1 + $0xf0] sm:$0xff]
        %v421 = vld [vmem:[%s1 + $0xf8] sm:$0xff]
        %v422 = vld [vmem:[%s1 + $0x100] sm:$0xff]
        %v423 = vld [vmem:[%s1 + $0x108] sm:$0xff]
        %v424 = vld [vmem:[%s1 + $0x110] sm:$0xff]
        %v425 = vld [vmem:[%s1 + $0x118] sm:$0xff]
        %v426 = vld [vmem:[%s1 + $0x120] sm:$0xff]
        %v427 = vld [vmem:[%s1 + $0x128] sm:$0xff]
        %v428 = vld [vmem:[%s1 + $0x130] sm:$0xff]
        %v429 = vld [vmem:[%s1 + $0x138] sm:$0xff]
        %v430 = vld [vmem:[%s1 + $0x140] sm:$0xff]
        %v431 = vld [vmem:[%s1 + $0x148] sm:$0xff]
        %v432 = vld [vmem:[%s1 + $0x150] sm:$0xff]
        %v433 = vld [vmem:[%s1 + $0x158] sm:$0xff]
        %v434 = vld [vmem:[%s1 + $0x160] sm:$0xff]
        %v435 = vld [vmem:[%s1 + $0x168] sm:$0xff]
        %v436 = vld [vmem:[%s1 + $0x170] sm:$0xff]
        %v437 = vld [vmem:[%s1 + $0x178] sm:$0xff]
        %v438 = vld [vmem:[%s1 + $0x180] sm:$0xff]
        %v439 = vld [vmem:[%s1 + $0x188] sm:$0xff]
        %v440 = vld [vmem:[%s1 + $0x190] sm:$0xff]
        %v441 = vld [vmem:[%s1 + $0x198] sm:$0xff]
        %v442 = vld [vmem:[%s1 + $0x1a0] sm:$0xff]
        %v443 = vld [vmem:[%s1 + $0x1a8] sm:$0xff]
        %v444 = vld [vmem:[%s1 + $0x1b0] sm:$0xff]
        %v445 = vld [vmem:[%s1 + $0x1b8] sm:$0xff]
        %v446 = vld [vmem:[%s1 + $0x1c0] sm:$0xff]
        %v447 = vld [vmem:[%s1 + $0x1c8] sm:$0xff]
        %v448 = vld [vmem:[%s1 + $0x1d0] sm:$0xff]
        %v449 = vld [vmem:[%s1 + $0x1d8] sm:$0xff]
        %v450 = vld [vmem:[%s1 + $0x1e0] sm:$0xff]
        %v451 = vld [vmem:[%s1 + $0x1e8] sm:$0xff]
        %v452 = vld [vmem:[%s1 + $0x1f0] sm:$0xff]
        %v453 = vld [vmem:[%s1 + $0x1f8] sm:$0xff]
        %v454 = vld [vmem:[%s1 + $0x200] sm:$0xff]
        %v455 = vld [vmem:[%s1 + $0x208] sm:$0xff]
        %v456 = vld [vmem:[%s1 + $0x210] sm:$0xff]
        %v457 = vld [vmem:[%s1 + $0x218] sm:$0xff]
        %v458 = vld [vmem:[%s1 + $0x220] sm:$0xff]
        %v459 = vld [vmem:[%s1 + $0x228] sm:$0xff]
        %v460 = vld [vmem:[%s1 + $0x230] sm:$0xff]
        %v461 = vld [vmem:[%s1 + $0x238] sm:$0xff]
        %v462 = vld [vmem:[%s1 + $0x240] sm:$0xff]
        %v463 = vld [vmem:[%s1 + $0x248] sm:$0xff]
        %v464 = vld [vmem:[%s1 + $0x250] sm:$0xff]
        %v465 = vld [vmem:[%s1 + $0x258] sm:$0xff]
        %v466 = vld [vmem:[%s1 + $0x260] sm:$0xff]
        %v467 = vld [vmem:[%s1 + $0x268] sm:$0xff]
        %v468 = vld [vmem:[%s1 + $0x270] sm:$0xff]
        %v469 = vld [vmem:[%s1 + $0x278] sm:$0xff]
        %v470 = vld [vmem:[%s1 + $0x280] sm:$0xff]
        %v471 = vld [vmem:[%s1 + $0x288] sm:$0xff]
        %v472 = vld [vmem:[%s1 + $0x290] sm:$0xff]
        %v473 = vld [vmem:[%s1 + $0x298] sm:$0xff]
        %v474 = vld [vmem:[%s1 + $0x2a0] sm:$0xff]
        %v475 = vld [vmem:[%s1 + $0x2a8] sm:$0xff]
        %v476 = vld [vmem:[%s1 + $0x2b0] sm:$0xff]
        %v477 = vld [vmem:[%s1 + $0x2b8] sm:$0xff]
        %v478 = vld [vmem:[%s1 + $0x2c0] sm:$0xff]
        %v479 = vld [vmem:[%s1 + $0x2c8] sm:$0xff]
        %v480 = vld [vmem:[%s1 + $0x2d0] sm:$0xff]
        %v481 = vld [vmem:[%s1 + $0x2d8] sm:$0xff]
        %v482 = vld [vmem:[%s1 + $0x2e0] sm:$0xff]
        %v483 = vld [vmem:[%s1 + $0x2e8] sm:$0xff]
        %v484 = vld [vmem:[%s1 + $0x2f0] sm:$0xff]
        %v485 = vld [vmem:[%s1 + $0x2f8] sm:$0xff]
        %486 = vmatprep.subr.mxu0 %v391
        %487 = vmatpush1.msra.mxu0 %v390
        %488 = vmatprep.subr.mxu0 %v393
        %489 = vmatpush1.msra.mxu0 %v392
        %490 = vmatprep.subr.mxu0 %v395
        %491 = vmatpush1.msra.mxu0 %v394
        %492 = vmatprep.subr.mxu0 %v397
        %493 = vmatpush1.msra.mxu0 %v396
        %494 = vmatprep.subr.mxu0 %v399
        %495 = vmatpush1.msra.mxu0 %v398
        %496 = vmatprep.subr.mxu0 %v401
        %497 = vmatpush1.msra.mxu0 %v400
        %498 = vmatprep.subr.mxu0 %v403
        %499 = vmatpush1.msra.mxu0 %v402
        %500 = vmatprep.subr.mxu0 %v405
        %501 = vmatpush1.msra.mxu0 %v404
        %502 = vmatprep.subr.mxu0 %v407
        %503 = vmatpush1.msra.mxu0 %v406
        %504 = vmatprep.subr.mxu0 %v409
        %505 = vmatpush1.msra.mxu0 %v408
        %506 = vmatprep.subr.mxu0 %v411
        %507 = vmatpush1.msra.mxu0 %v410
        %508 = vmatprep.subr.mxu0 %v413
        %509 = vmatpush1.msra.mxu0 %v412
        %510 = vmatprep.subr.mxu0 %v415
        %511 = vmatpush1.msra.mxu0 %v414
        %512 = vmatprep.subr.mxu0 %v417
        %513 = vmatpush1.msra.mxu0 %v416
        %514 = vmatprep.subr.mxu0 %v419
        %515 = vmatpush1.msra.mxu0 %v418
        %516 = vmatprep.subr.mxu0 %v421
        %517 = vmatpush1.msra.mxu0 %v420
        %518 = vmatprep.subr.mxu0 %v423
        %519 = vmatpush1.msra.mxu0 %v422
        %520 = vmatprep.subr.mxu0 %v425
        %521 = vmatpush1.msra.mxu0 %v424
        %522 = vmatprep.subr.mxu0 %v427
        %523 = vmatpush1.msra.mxu0 %v426
        %524 = vmatprep.subr.mxu0 %v429
        %525 = vmatpush1.msra.mxu0 %v428
        %526 = vmatprep.subr.mxu0 %v431
        %527 = vmatpush1.msra.mxu0 %v430
        %528 = vmatprep.subr.mxu0 %v433
        %529 = vmatpush1.msra.mxu0 %v432
        %530 = vmatprep.subr.mxu0 %v435
        %531 = vmatpush1.msra.mxu0 %v434
        %532 = vmatprep.subr.mxu0 %v437
        %533 = vmatpush1.msra.mxu0 %v436
        %534 = vmatprep.subr.mxu0 %v439
        %535 = vmatpush1.msra.mxu0 %v438
        %536 = vmatprep.subr.mxu0 %v441
        %537 = vmatpush1.msra.mxu0 %v440
        %538 = vmatprep.subr.mxu0 %v443
        %539 = vmatpush1.msra.mxu0 %v442
        %540 = vmatprep.subr.mxu0 %v445
        %541 = vmatpush1.msra.mxu0 %v444
        %542 = vmatprep.subr.mxu0 %v447
        %543 = vmatpush1.msra.mxu0 %v446
        %544 = vmatprep.subr.mxu0 %v449
        %545 = vmatpush1.msra.mxu0 %v448
        %546 = vmatprep.subr.mxu0 %v451
        %547 = vmatpush1.msra.mxu0 %v450
        %548 = vmatprep.subr.mxu0 %v453
        %549 = vmatpush1.msra.mxu0 %v452
        %550 = vmatprep.mubr.f32.mxu0 %v295
        %551 = vmatmul.mubr.f32.gmra.mrb[0].mxu0 %v294
        %v552 = vpop.f32.mrb[0].mxu0
        %v553 = vadd.f32 0.0, %v552
        %v554 = vpop.f32.mrb[0].mxu0
        %v555 = vadd.f32 0.0, %v554
        %556 = vmatprep.mubr.f32.mxu0 %v298
        %557 = vmatmul.mubr.f32.gmra.mrb[0].mxu0 %v297
        %v558 = vpop.f32.mrb[0].mxu0
        %v559 = vadd.f32 0.0, %v558
        %v560 = vpop.f32.mrb[0].mxu0
        %v561 = vadd.f32 0.0, %v560
        %562 = vmatprep.mubr.f32.mxu0 %v301
        %563 = vmatmul.mubr.f32.gmra.mrb[0].mxu0 %v300
        %v564 = vpop.f32.mrb[0].mxu0
        %v565 = vadd.f32 0.0, %v564
        %v566 = vpop.f32.mrb[0].mxu0
        %v567 = vadd.f32 0.0, %v566
        %568 = vmatprep.mubr.f32.mxu0 %v304
        %569 = vmatmul.mubr.f32.gmra.mrb[0].mxu0 %v303
        %v570 = vpop.f32.mrb[0].mxu0
        %v571 = vadd.f32 0.0, %v570
        %v572 = vpop.f32.mrb[0].mxu0
        %v573 = vadd.f32 0.0, %v572
        %574 = vmatprep.mubr.f32.mxu0 %v307
        %575 = vmatmul.mubr.f32.gmra.mrb[0].mxu0 %v306
        %v576 = vpop.f32.mrb[0].mxu0
        %v577 = vadd.f32 0.0, %v576
        %v578 = vpop.f32.mrb[0].mxu0
        %v579 = vadd.f32 0.0, %v578
        %580 = vmatprep.mubr.f32.mxu0 %v310
        %581 = vmatmul.mubr.f32.gmra.mrb[0].mxu0 %v309
        %v582 = vpop.f32.mrb[0].mxu0
        %v583 = vadd.f32 0.0, %v582
        %v584 = vpop.f32.mrb[0].mxu0
        %v585 = vadd.f32 0.0, %v584
        %586 = vmatprep.mubr.f32.mxu0 %v313
        %587 = vmatmul.mubr.f32.gmra.mrb[0].mxu0 %v312
        %v588 = vpop.f32.mrb[0].mxu0
        %v589 = vadd.f32 0.0, %v588
        %v590 = vpop.f32.mrb[0].mxu0
        %v591 = vadd.f32 0.0, %v590
        %592 = vmatprep.mubr.f32.mxu0 %v316
        %593 = vmatmul.mubr.f32.gmra.mrb[0].mxu0 %v315
        %v594 = vpop.f32.mrb[0].mxu0
        %v595 = vadd.f32 0.0, %v594
        %v596 = vpop.f32.mrb[0].mxu0
        %v597 = vadd.f32 0.0, %v596
        %598 = vmatprep.mubr.f32.mxu0 %v319
        %599 = vmatmul.mubr.f32.gmra.mrb[0].mxu0 %v318
        %v600 = vpop.f32.mrb[0].mxu0
        %v601 = vadd.f32 0.0, %v600
        %v602 = vpop.f32.mrb[0].mxu0
        %v603 = vadd.f32 0.0, %v602
        %604 = vmatprep.mubr.f32.mxu0 %v322
        %605 = vmatmul.mubr.f32.gmra.mrb[0].mxu0 %v321
        %v606 = vpop.f32.mrb[0].mxu0
        %v607 = vadd.f32 0.0, %v606
        %v608 = vpop.f32.mrb[0].mxu0
        %v609 = vadd.f32 0.0, %v608
        %610 = vmatprep.mubr.f32.mxu0 %v325
        %611 = vmatmul.mubr.f32.gmra.mrb[0].mxu0 %v324
        %v612 = vpop.f32.mrb[0].mxu0
        %v613 = vadd.f32 0.0, %v612
        %v614 = vpop.f32.mrb[0].mxu0
        %v615 = vadd.f32 0.0, %v614
        %616 = vmatprep.mubr.f32.mxu0 %v328
        %617 = vmatmul.mubr.f32.gmra.mrb[0].mxu0 %v327
        %v618 = vpop.f32.mrb[0].mxu0
        %v619 = vadd.f32 0.0, %v618
        %v620 = vpop.f32.mrb[0].mxu0
        %v621 = vadd.f32 0.0, %v620
        %622 = vmatprep.mubr.f32.mxu0 %v331
        %623 = vmatmul.mubr.f32.gmra.mrb[0].mxu0 %v330
        %v624 = vpop.f32.mrb[0].mxu0
        %v625 = vadd.f32 0.0, %v624
        %v626 = vpop.f32.mrb[0].mxu0
        %v627 = vadd.f32 0.0, %v626
        %628 = vmatprep.mubr.f32.mxu0 %v334
        %629 = vmatmul.mubr.f32.gmra.mrb[0].mxu0 %v333
        %v630 = vpop.f32.mrb[0].mxu0
        %v631 = vadd.f32 0.0, %v630
        %v632 = vpop.f32.mrb[0].mxu0
        %v633 = vadd.f32 0.0, %v632
        %634 = vmatprep.mubr.f32.mxu0 %v337
        %635 = vmatmul.mubr.f32.gmra.mrb[0].mxu0 %v336
        %v636 = vpop.f32.mrb[0].mxu0
        %v637 = vadd.f32 0.0, %v636
        %v638 = vpop.f32.mrb[0].mxu0
        %v639 = vadd.f32 0.0, %v638
        %640 = vmatprep.mubr.f32.mxu0 %v340
        %641 = vmatmul.mubr.f32.gmra.mrb[0].mxu0 %v339
        %v642 = vpop.f32.mrb[0].mxu0
        %v643 = vadd.f32 0.0, %v642
        %v644 = vpop.f32.mrb[0].mxu0
        %v645 = vadd.f32 0.0, %v644
        %646 = vmatprep.mubr.f32.mxu0 %v343
        %647 = vmatmul.mubr.f32.gmra.mrb[0].mxu0 %v342
        %v648 = vpop.f32.mrb[0].mxu0
        %v649 = vadd.f32 0.0, %v648
        %v650 = vpop.f32.mrb[0].mxu0
        %v651 = vadd.f32 0.0, %v650
        %652 = vmatprep.mubr.f32.mxu0 %v346
        %653 = vmatmul.mubr.f32.gmra.mrb[0].mxu0 %v345
        %v654 = vpop.f32.mrb[0].mxu0
        %v655 = vadd.f32 0.0, %v654
        %v656 = vpop.f32.mrb[0].mxu0
        %v657 = vadd.f32 0.0, %v656
        %658 = vmatprep.mubr.f32.mxu0 %v349
        %659 = vmatmul.mubr.f32.gmra.mrb[0].mxu0 %v348
        %v660 = vpop.f32.mrb[0].mxu0
        %v661 = vadd.f32 0.0, %v660
        %v662 = vpop.f32.mrb[0].mxu0
        %v663 = vadd.f32 0.0, %v662
        %664 = vmatprep.mubr.f32.mxu0 %v352
        %665 = vmatmul.mubr.f32.gmra.mrb[0].mxu0 %v351
        %v666 = vpop.f32.mrb[0].mxu0
        %v667 = vadd.f32 0.0, %v666
        %v668 = vpop.f32.mrb[0].mxu0
        %v669 = vadd.f32 0.0, %v668
        %670 = vmatprep.mubr.f32.mxu0 %v355
        %671 = vmatmul.mubr.f32.gmra.mrb[0].mxu0 %v354
        %v672 = vpop.f32.mrb[0].mxu0
        %v673 = vadd.f32 0.0, %v672
        %v674 = vpop.f32.mrb[0].mxu0
        %v675 = vadd.f32 0.0, %v674
        %676 = vmatprep.mubr.f32.mxu0 %v358
        %677 = vmatmul.mubr.f32.gmra.mrb[0].mxu0 %v357
        %v678 = vpop.f32.mrb[0].mxu0
        %v679 = vadd.f32 0.0, %v678
        %v680 = vpop.f32.mrb[0].mxu0
        %v681 = vadd.f32 0.0, %v680
        %682 = vmatprep.mubr.f32.mxu0 %v361
        %683 = vmatmul.mubr.f32.gmra.mrb[0].mxu0 %v360
        %v684 = vpop.f32.mrb[0].mxu0
        %v685 = vadd.f32 0.0, %v684
        %v686 = vpop.f32.mrb[0].mxu0
        %v687 = vadd.f32 0.0, %v686
        %688 = vmatprep.mubr.f32.mxu0 %v364
        %689 = vmatmul.mubr.f32.gmra.mrb[0].mxu0 %v363
        %v690 = vpop.f32.mrb[0].mxu0
        %v691 = vadd.f32 0.0, %v690
        %v692 = vpop.f32.mrb[0].mxu0
        %v693 = vadd.f32 0.0, %v692
        %694 = vmatprep.mubr.f32.mxu0 %v367
        %695 = vmatmul.mubr.f32.gmra.mrb[0].mxu0 %v366
        %v696 = vpop.f32.mrb[0].mxu0
        %v697 = vadd.f32 0.0, %v696
        %v698 = vpop.f32.mrb[0].mxu0
        %v699 = vadd.f32 0.0, %v698
        %700 = vmatprep.mubr.f32.mxu0 %v370
        %701 = vmatmul.mubr.f32.gmra.mrb[0].mxu0 %v369
        %v702 = vpop.f32.mrb[0].mxu0
        %v703 = vadd.f32 0.0, %v702
        %v704 = vpop.f32.mrb[0].mxu0
        %v705 = vadd.f32 0.0, %v704
        %706 = vmatprep.mubr.f32.mxu0 %v373
        %707 = vmatmul.mubr.f32.gmra.mrb[0].mxu0 %v372
        %v708 = vpop.f32.mrb[0].mxu0
        %v709 = vadd.f32 0.0, %v708
        %v710 = vpop.f32.mrb[0].mxu0
        %v711 = vadd.f32 0.0, %v710
        %712 = vmatprep.mubr.f32.mxu0 %v376
        %713 = vmatmul.mubr.f32.gmra.mrb[0].mxu0 %v375
        %v714 = vpop.f32.mrb[0].mxu0
        %v715 = vadd.f32 0.0, %v714
        %v716 = vpop.f32.mrb[0].mxu0
        %v717 = vadd.f32 0.0, %v716
        %718 = vmatprep.mubr.f32.mxu0 %v379
        %719 = vmatmul.mubr.f32.gmra.mrb[0].mxu0 %v378
        %v720 = vpop.f32.mrb[0].mxu0
        %v721 = vadd.f32 0.0, %v720
        %v722 = vpop.f32.mrb[0].mxu0
        %v723 = vadd.f32 0.0, %v722
        %724 = vmatprep.mubr.f32.mxu0 %v382
        %725 = vmatmul.mubr.f32.gmra.mrb[0].mxu0 %v381
        %v726 = vpop.f32.mrb[0].mxu0
        %v727 = vadd.f32 0.0, %v726
        %v728 = vpop.f32.mrb[0].mxu0
        %v729 = vadd.f32 0.0, %v728
        %730 = vmatprep.mubr.f32.mxu0 %v385
        %731 = vmatmul.mubr.f32.gmra.mrb[0].mxu0 %v384
        %v732 = vpop.f32.mrb[0].mxu0
        %v733 = vadd.f32 0.0, %v732
        %v734 = vpop.f32.mrb[0].mxu0
        %v735 = vadd.f32 0.0, %v734
        %736 = vmatprep.mubr.f32.mxu0 %v388
        %737 = vmatmul.mubr.f32.gmra.mrb[0].mxu0 %v387
        %v738 = vpop.f32.mrb[0].mxu0
        %v739 = vadd.f32 0.0, %v738
        %v740 = vpop.f32.mrb[0].mxu0
        %v741 = vadd.f32 0.0, %v740
        %742 = vdwg.mxu0
        %743 = vmatprep.subr.mxu0 %v455
        %744 = vmatpush1.msra.mxu0 %v454
        %745 = vmatprep.subr.mxu0 %v457
        %746 = vmatpush1.msra.mxu0 %v456
        %747 = vmatprep.subr.mxu0 %v459
        %748 = vmatpush1.msra.mxu0 %v458
        %749 = vmatprep.subr.mxu0 %v461
        %750 = vmatpush1.msra.mxu0 %v460
        %751 = vmatprep.subr.mxu0 %v463
        %752 = vmatpush1.msra.mxu0 %v462
        %753 = vmatprep.subr.mxu0 %v465
        %754 = vmatpush1.msra.mxu0 %v464
        %755 = vmatprep.subr.mxu0 %v467
        %756 = vmatpush1.msra.mxu0 %v466
        %757 = vmatprep.subr.mxu0 %v469
        %758 = vmatpush1.msra.mxu0 %v468
        %759 = vmatprep.subr.mxu0 %v471
        %760 = vmatpush1.msra.mxu0 %v470
        %761 = vmatprep.subr.mxu0 %v473
        %762 = vmatpush1.msra.mxu0 %v472
        %763 = vmatprep.subr.mxu0 %v475
        %764 = vmatpush1.msra.mxu0 %v474
        %765 = vmatprep.subr.mxu0 %v477
        %766 = vmatpush1.msra.mxu0 %v476
        %767 = vmatprep.subr.mxu0 %v479
        %768 = vmatpush1.msra.mxu0 %v478
        %769 = vmatprep.subr.mxu0 %v481
        %770 = vmatpush1.msra.mxu0 %v480
        %771 = vmatprep.subr.mxu0 %v483
        %772 = vmatpush1.msra.mxu0 %v482
        %773 = vmatprep.subr.mxu0 %v485
        %774 = vmatpush1.msra.mxu0 %v484
        %775 = vmatprep.subr.mxu0 0.0
        %776 = vmatpush1.msra.mxu0 0.0
        %777 = vmatprep.subr.mxu0 0.0
        %778 = vmatpush1.msra.mxu0 0.0
        %779 = vmatprep.subr.mxu0 0.0
        %780 = vmatpush1.msra.mxu0 0.0
        %781 = vmatprep.subr.mxu0 0.0
        %782 = vmatpush1.msra.mxu0 0.0
        %783 = vmatprep.subr.mxu0 0.0
        %784 = vmatpush1.msra.mxu0 0.0
        %785 = vmatprep.subr.mxu0 0.0
        %786 = vmatpush1.msra.mxu0 0.0
        %787 = vmatprep.subr.mxu0 0.0
        %788 = vmatpush1.msra.mxu0 0.0
        %789 = vmatprep.subr.mxu0 0.0
        %790 = vmatpush1.msra.mxu0 0.0
        %791 = vmatprep.subr.mxu0 0.0
        %792 = vmatpush1.msra.mxu0 0.0
        %793 = vmatprep.subr.mxu0 0.0
        %794 = vmatpush1.msra.mxu0 0.0
        %795 = vmatprep.subr.mxu0 0.0
        %796 = vmatpush1.msra.mxu0 0.0
        %797 = vmatprep.subr.mxu0 0.0
        %798 = vmatpush1.msra.mxu0 0.0
        %799 = vmatprep.subr.mxu0 0.0
        %800 = vmatpush1.msra.mxu0 0.0
        %801 = vmatprep.subr.mxu0 0.0
        %802 = vmatpush1.msra.mxu0 0.0
        %803 = vmatprep.subr.mxu0 0.0
        %804 = vmatpush1.msra.mxu0 0.0
        %805 = vmatprep.subr.mxu0 0.0
        %806 = vmatpush1.msra.mxu0 0.0
        %807 = vmatprep.mubr.f32.mxu0 0.0
        %808 = vmatmul.mubr.f32.gmra.mrb[0].mxu0 %v296
        %v809 = vpop.f32.mrb[0].mxu0
        %v810 = vadd.f32 %v553, %v809
        %v811 = vpop.f32.mrb[0].mxu0
        %v812 = vadd.f32 %v555, %v811
        %813 = vmatprep.mubr.f32.mxu0 0.0
        %814 = vmatmul.mubr.f32.gmra.mrb[0].mxu0 %v299
        %v815 = vpop.f32.mrb[0].mxu0
        %v816 = vadd.f32 %v559, %v815
        %v817 = vpop.f32.mrb[0].mxu0
        %v818 = vadd.f32 %v561, %v817
        %819 = vmatprep.mubr.f32.mxu0 0.0
        %820 = vmatmul.mubr.f32.gmra.mrb[0].mxu0 %v302
        %v821 = vpop.f32.mrb[0].mxu0
        %v822 = vadd.f32 %v565, %v821
        %v823 = vpop.f32.mrb[0].mxu0
        %v824 = vadd.f32 %v567, %v823
        %825 = vmatprep.mubr.f32.mxu0 0.0
        %826 = vmatmul.mubr.f32.gmra.mrb[0].mxu0 %v305
        %v827 = vpop.f32.mrb[0].mxu0
        %v828 = vadd.f32 %v571, %v827
        %v829 = vpop.f32.mrb[0].mxu0
        %v830 = vadd.f32 %v573, %v829
        %831 = vmatprep.mubr.f32.mxu0 0.0
        %832 = vmatmul.mubr.f32.gmra.mrb[0].mxu0 %v308
        %v833 = vpop.f32.mrb[0].mxu0
        %v834 = vadd.f32 %v577, %v833
        %v835 = vpop.f32.mrb[0].mxu0
        %v836 = vadd.f32 %v579, %v835
        %837 = vmatprep.mubr.f32.mxu0 0.0
        %838 = vmatmul.mubr.f32.gmra.mrb[0].mxu0 %v311
        %v839 = vpop.f32.mrb[0].mxu0
        %v840 = vadd.f32 %v583, %v839
        %v841 = vpop.f32.mrb[0].mxu0
        %v842 = vadd.f32 %v585, %v841
        %843 = vmatprep.mubr.f32.mxu0 0.0
        %844 = vmatmul.mubr.f32.gmra.mrb[0].mxu0 %v314
        %v845 = vpop.f32.mrb[0].mxu0
        %v846 = vadd.f32 %v589, %v845
        %v847 = vpop.f32.mrb[0].mxu0
        %v848 = vadd.f32 %v591, %v847
        %849 = vmatprep.mubr.f32.mxu0 0.0
        %850 = vmatmul.mubr.f32.gmra.mrb[0].mxu0 %v317
        %v851 = vpop.f32.mrb[0].mxu0
        %v852 = vadd.f32 %v595, %v851
        %v853 = vpop.f32.mrb[0].mxu0
        %v854 = vadd.f32 %v597, %v853
        %855 = vmatprep.mubr.f32.mxu0 0.0
        %856 = vmatmul.mubr.f32.gmra.mrb[0].mxu0 %v320
        %v857 = vpop.f32.mrb[0].mxu0
        %v858 = vadd.f32 %v601, %v857
        %v859 = vpop.f32.mrb[0].mxu0
        %v860 = vadd.f32 %v603, %v859
        %861 = vmatprep.mubr.f32.mxu0 0.0
        %862 = vmatmul.mubr.f32.gmra.mrb[0].mxu0 %v323
        %v863 = vpop.f32.mrb[0].mxu0
        %v864 = vadd.f32 %v607, %v863
        %v865 = vpop.f32.mrb[0].mxu0
        %v866 = vadd.f32 %v609, %v865
        %867 = vmatprep.mubr.f32.mxu0 0.0
        %868 = vmatmul.mubr.f32.gmra.mrb[0].mxu0 %v326
        %v869 = vpop.f32.mrb[0].mxu0
        %v870 = vadd.f32 %v613, %v869
        %v871 = vpop.f32.mrb[0].mxu0
        %v872 = vadd.f32 %v615, %v871
        %873 = vmatprep.mubr.f32.mxu0 0.0
        %874 = vmatmul.mubr.f32.gmra.mrb[0].mxu0 %v329
        %v875 = vpop.f32.mrb[0].mxu0
        %v876 = vadd.f32 %v619, %v875
        %v877 = vpop.f32.mrb[0].mxu0
        %v878 = vadd.f32 %v621, %v877
        %879 = vmatprep.mubr.f32.mxu0 0.0
        %880 = vmatmul.mubr.f32.gmra.mrb[0].mxu0 %v332
        %v881 = vpop.f32.mrb[0].mxu0
        %v882 = vadd.f32 %v625, %v881
        %v883 = vpop.f32.mrb[0].mxu0
        %v884 = vadd.f32 %v627, %v883
        %885 = vmatprep.mubr.f32.mxu0 0.0
        %886 = vmatmul.mubr.f32.gmra.mrb[0].mxu0 %v335
        %v887 = vpop.f32.mrb[0].mxu0
        %v888 = vadd.f32 %v631, %v887
        %v889 = vpop.f32.mrb[0].mxu0
        %v890 = vadd.f32 %v633, %v889
        %891 = vmatprep.mubr.f32.mxu0 0.0
        %892 = vmatmul.mubr.f32.gmra.mrb[0].mxu0 %v338
        %v893 = vpop.f32.mrb[0].mxu0
        %v894 = vadd.f32 %v637, %v893
        %v895 = vpop.f32.mrb[0].mxu0
        %v896 = vadd.f32 %v639, %v895
        %897 = vmatprep.mubr.f32.mxu0 0.0
        %898 = vmatmul.mubr.f32.gmra.mrb[0].mxu0 %v341
        %v899 = vpop.f32.mrb[0].mxu0
        %v900 = vadd.f32 %v643, %v899
        %v901 = vpop.f32.mrb[0].mxu0
        %v902 = vadd.f32 %v645, %v901
        %903 = vmatprep.mubr.f32.mxu0 0.0
        %904 = vmatmul.mubr.f32.gmra.mrb[0].mxu0 %v344
        %v905 = vpop.f32.mrb[0].mxu0
        %v906 = vadd.f32 %v649, %v905
        %v907 = vpop.f32.mrb[0].mxu0
        %v908 = vadd.f32 %v651, %v907
        %909 = vmatprep.mubr.f32.mxu0 0.0
        %910 = vmatmul.mubr.f32.gmra.mrb[0].mxu0 %v347
        %v911 = vpop.f32.mrb[0].mxu0
        %v912 = vadd.f32 %v655, %v911
        %v913 = vpop.f32.mrb[0].mxu0
        %v914 = vadd.f32 %v657, %v913
        %915 = vmatprep.mubr.f32.mxu0 0.0
        %916 = vmatmul.mubr.f32.gmra.mrb[0].mxu0 %v350
        %v917 = vpop.f32.mrb[0].mxu0
        %v918 = vadd.f32 %v661, %v917
        %v919 = vpop.f32.mrb[0].mxu0
        %v920 = vadd.f32 %v663, %v919
        %921 = vmatprep.mubr.f32.mxu0 0.0
        %922 = vmatmul.mubr.f32.gmra.mrb[0].mxu0 %v353
        %v923 = vpop.f32.mrb[0].mxu0
        %v924 = vadd.f32 %v667, %v923
        %v925 = vpop.f32.mrb[0].mxu0
        %v926 = vadd.f32 %v669, %v925
        %927 = vmatprep.mubr.f32.mxu0 0.0
        %928 = vmatmul.mubr.f32.gmra.mrb[0].mxu0 %v356
        %v929 = vpop.f32.mrb[0].mxu0
        %v930 = vadd.f32 %v673, %v929
        %v931 = vpop.f32.mrb[0].mxu0
        %v932 = vadd.f32 %v675, %v931
        %933 = vmatprep.mubr.f32.mxu0 0.0
        %934 = vmatmul.mubr.f32.gmra.mrb[0].mxu0 %v359
        %v935 = vpop.f32.mrb[0].mxu0
        %v936 = vadd.f32 %v679, %v935
        %v937 = vpop.f32.mrb[0].mxu0
        %v938 = vadd.f32 %v681, %v937
        %939 = vmatprep.mubr.f32.mxu0 0.0
        %940 = vmatmul.mubr.f32.gmra.mrb[0].mxu0 %v362
        %v941 = vpop.f32.mrb[0].mxu0
        %v942 = vadd.f32 %v685, %v941
        %v943 = vpop.f32.mrb[0].mxu0
        %v944 = vadd.f32 %v687, %v943
        %945 = vmatprep.mubr.f32.mxu0 0.0
        %946 = vmatmul.mubr.f32.gmra.mrb[0].mxu0 %v365
        %v947 = vpop.f32.mrb[0].mxu0
        %v948 = vadd.f32 %v691, %v947
        %v949 = vpop.f32.mrb[0].mxu0
        %v950 = vadd.f32 %v693, %v949
        %951 = vmatprep.mubr.f32.mxu0 0.0
        %952 = vmatmul.mubr.f32.gmra.mrb[0].mxu0 %v368
        %v953 = vpop.f32.mrb[0].mxu0
        %v954 = vadd.f32 %v697, %v953
        %v955 = vpop.f32.mrb[0].mxu0
        %v956 = vadd.f32 %v699, %v955
        %957 = vmatprep.mubr.f32.mxu0 0.0
        %958 = vmatmul.mubr.f32.gmra.mrb[0].mxu0 %v371
        %v959 = vpop.f32.mrb[0].mxu0
        %v960 = vadd.f32 %v703, %v959
        %v961 = vpop.f32.mrb[0].mxu0
        %v962 = vadd.f32 %v705, %v961
        %963 = vmatprep.mubr.f32.mxu0 0.0
        %964 = vmatmul.mubr.f32.gmra.mrb[0].mxu0 %v374
        %v965 = vpop.f32.mrb[0].mxu0
        %v966 = vadd.f32 %v709, %v965
        %v967 = vpop.f32.mrb[0].mxu0
        %v968 = vadd.f32 %v711, %v967
        %969 = vmatprep.mubr.f32.mxu0 0.0
        %970 = vmatmul.mubr.f32.gmra.mrb[0].mxu0 %v377
        %v971 = vpop.f32.mrb[0].mxu0
        %v972 = vadd.f32 %v715, %v971
        %v973 = vpop.f32.mrb[0].mxu0
        %v974 = vadd.f32 %v717, %v973
        %975 = vmatprep.mubr.f32.mxu0 0.0
        %976 = vmatmul.mubr.f32.gmra.mrb[0].mxu0 %v380
        %v977 = vpop.f32.mrb[0].mxu0
        %v978 = vadd.f32 %v721, %v977
        %v979 = vpop.f32.mrb[0].mxu0
        %v980 = vadd.f32 %v723, %v979
        %981 = vmatprep.mubr.f32.mxu0 0.0
        %982 = vmatmul.mubr.f32.gmra.mrb[0].mxu0 %v383
        %v983 = vpop.f32.mrb[0].mxu0
        %v984 = vadd.f32 %v727, %v983
        %v985 = vpop.f32.mrb[0].mxu0
        %v986 = vadd.f32 %v729, %v985
        %987 = vmatprep.mubr.f32.mxu0 0.0
        %988 = vmatmul.mubr.f32.gmra.mrb[0].mxu0 %v386
        %v989 = vpop.f32.mrb[0].mxu0
        %v990 = vadd.f32 %v733, %v989
        %v991 = vpop.f32.mrb[0].mxu0
        %v992 = vadd.f32 %v735, %v991
        %993 = vmatprep.mubr.f32.mxu0 0.0
        %994 = vmatmul.mubr.f32.gmra.mrb[0].mxu0 %v389
        %v995 = vpop.f32.mrb[0].mxu0
        %v996 = vadd.f32 %v739, %v995
        %v997 = vpop.f32.mrb[0].mxu0
        %v998 = vadd.f32 %v741, %v997
        %999 = vdwg.mxu0
        %vm1000 = vcmask 523264
        %1001 = vst.msk [vmem:[%s272] sm:$0xff] %vm1000, %v810
        %1002 = vst.msk [vmem:[%s272 + $0x8] sm:$0xff] %vm1000, %v816
        %1003 = vst.msk [vmem:[%s272 + $0x10] sm:$0xff] %vm1000, %v822
        %1004 = vst.msk [vmem:[%s272 + $0x18] sm:$0xff] %vm1000, %v828
        %1005 = vst.msk [vmem:[%s272 + $0x20] sm:$0xff] %vm1000, %v834
        %1006 = vst.msk [vmem:[%s272 + $0x28] sm:$0xff] %vm1000, %v840
        %1007 = vst.msk [vmem:[%s272 + $0x30] sm:$0xff] %vm1000, %v846
        %1008 = vst.msk [vmem:[%s272 + $0x38] sm:$0xff] %vm1000, %v852
        %1009 = vst.msk [vmem:[%s272 + $0x40] sm:$0xff] %vm1000, %v858
        %1010 = vst.msk [vmem:[%s272 + $0x48] sm:$0xff] %vm1000, %v864
        %1011 = vst.msk [vmem:[%s272 + $0x50] sm:$0xff] %vm1000, %v870
        %1012 = vst.msk [vmem:[%s272 + $0x58] sm:$0xff] %vm1000, %v876
        %1013 = vst.msk [vmem:[%s272 + $0x60] sm:$0xff] %vm1000, %v882
        %1014 = vst.msk [vmem:[%s272 + $0x68] sm:$0xff] %vm1000, %v888
        %1015 = vst.msk [vmem:[%s272 + $0x70] sm:$0xff] %vm1000, %v894
        %1016 = vst.msk [vmem:[%s272 + $0x78] sm:$0xff] %vm1000, %v900
        %1017 = vst.msk [vmem:[%s272 + $0x80] sm:$0xff] %vm1000, %v906
        %1018 = vst.msk [vmem:[%s272 + $0x88] sm:$0xff] %vm1000, %v912
        %1019 = vst.msk [vmem:[%s272 + $0x90] sm:$0xff] %vm1000, %v918
        %1020 = vst.msk [vmem:[%s272 + $0x98] sm:$0xff] %vm1000, %v924
        %1021 = vst.msk [vmem:[%s272 + $0xa0] sm:$0xff] %vm1000, %v930
        %1022 = vst.msk [vmem:[%s272 + $0xa8] sm:$0xff] %vm1000, %v936
        %1023 = vst.msk [vmem:[%s272 + $0xb0] sm:$0xff] %vm1000, %v942
        %1024 = vst.msk [vmem:[%s272 + $0xb8] sm:$0xff] %vm1000, %v948
        %1025 = vst.msk [vmem:[%s272 + $0xc0] sm:$0xff] %vm1000, %v954
        %1026 = vst.msk [vmem:[%s272 + $0xc8] sm:$0xff] %vm1000, %v960
        %1027 = vst.msk [vmem:[%s272 + $0xd0] sm:$0xff] %vm1000, %v966
        %1028 = vst.msk [vmem:[%s272 + $0xd8] sm:$0xff] %vm1000, %v972
        %1029 = vst.msk [vmem:[%s272 + $0xe0] sm:$0xff] %vm1000, %v978
        %1030 = vst.msk [vmem:[%s272 + $0xe8] sm:$0xff] %vm1000, %v984
        %1031 = vst.msk [vmem:[%s272 + $0xf0] sm:$0xff] %vm1000, %v990
        %1032 = vst.msk [vmem:[%s272 + $0xf8] sm:$0xff] %vm1000, %v996
        %1065 = vrot.lane.b32.xlu0 %v810, 64
        %v1066 = vpop.permute.xlu0 %1065
        %1067 = vrot.lane.b32.xlu0 %v816, 64
        %v1068 = vpop.permute.xlu0 %1067
        %1069 = vrot.lane.b32.xlu0 %v822, 64
        %v1070 = vpop.permute.xlu0 %1069
        %1071 = vrot.lane.b32.xlu0 %v828, 64
        %v1072 = vpop.permute.xlu0 %1071
        %1073 = vrot.lane.b32.xlu0 %v834, 64
        %v1074 = vpop.permute.xlu0 %1073
        %1075 = vrot.lane.b32.xlu0 %v840, 64
        %v1076 = vpop.permute.xlu0 %1075
        %1077 = vrot.lane.b32.xlu0 %v846, 64
        %v1078 = vpop.permute.xlu0 %1077
        %1079 = vrot.lane.b32.xlu0 %v852, 64
        %v1080 = vpop.permute.xlu0 %1079
        %1081 = vrot.lane.b32.xlu0 %v858, 64
        %v1082 = vpop.permute.xlu0 %1081
        %1083 = vrot.lane.b32.xlu0 %v864, 64
        %v1084 = vpop.permute.xlu0 %1083
        %1085 = vrot.lane.b32.xlu0 %v870, 64
        %v1086 = vpop.permute.xlu0 %1085
        %1087 = vrot.lane.b32.xlu0 %v876, 64
        %v1088 = vpop.permute.xlu0 %1087
        %1089 = vrot.lane.b32.xlu0 %v882, 64
        %v1090 = vpop.permute.xlu0 %1089
        %1091 = vrot.lane.b32.xlu0 %v888, 64
        %v1092 = vpop.permute.xlu0 %1091
        %1093 = vrot.lane.b32.xlu0 %v894, 64
        %v1094 = vpop.permute.xlu0 %1093
        %1095 = vrot.lane.b32.xlu0 %v900, 64
        %v1096 = vpop.permute.xlu0 %1095
        %1097 = vrot.lane.b32.xlu0 %v906, 64
        %v1098 = vpop.permute.xlu0 %1097
        %1099 = vrot.lane.b32.xlu0 %v912, 64
        %v1100 = vpop.permute.xlu0 %1099
        %1101 = vrot.lane.b32.xlu0 %v918, 64
        %v1102 = vpop.permute.xlu0 %1101
        %1103 = vrot.lane.b32.xlu0 %v924, 64
        %v1104 = vpop.permute.xlu0 %1103
        %1105 = vrot.lane.b32.xlu0 %v930, 64
        %v1106 = vpop.permute.xlu0 %1105
        %1107 = vrot.lane.b32.xlu0 %v936, 64
        %v1108 = vpop.permute.xlu0 %1107
        %1109 = vrot.lane.b32.xlu0 %v942, 64
        %v1110 = vpop.permute.xlu0 %1109
        %1111 = vrot.lane.b32.xlu0 %v948, 64
        %v1112 = vpop.permute.xlu0 %1111
        %1113 = vrot.lane.b32.xlu0 %v954, 64
        %v1114 = vpop.permute.xlu0 %1113
        %1115 = vrot.lane.b32.xlu0 %v960, 64
        %v1116 = vpop.permute.xlu0 %1115
        %1117 = vrot.lane.b32.xlu0 %v966, 64
        %v1118 = vpop.permute.xlu0 %1117
        %1119 = vrot.lane.b32.xlu0 %v972, 64
        %v1120 = vpop.permute.xlu0 %1119
        %1121 = vrot.lane.b32.xlu0 %v978, 64
        %v1122 = vpop.permute.xlu0 %1121
        %1123 = vrot.lane.b32.xlu0 %v984, 64
        %v1124 = vpop.permute.xlu0 %1123
        %1125 = vrot.lane.b32.xlu0 %v990, 64
        %v1126 = vpop.permute.xlu0 %1125
        %1127 = vrot.lane.b32.xlu0 %v996, 64
        %v1128 = vpop.permute.xlu0 %1127
        %1161 = vst.msk [vmem:[%s282] sm:$0xff] %vm1000, %v1066
        %1162 = vst.msk [vmem:[%s282 + $0x8] sm:$0xff] %vm1000, %v1068
        %1163 = vst.msk [vmem:[%s282 + $0x10] sm:$0xff] %vm1000, %v1070
        %1164 = vst.msk [vmem:[%s282 + $0x18] sm:$0xff] %vm1000, %v1072
        %1165 = vst.msk [vmem:[%s282 + $0x20] sm:$0xff] %vm1000, %v1074
        %1166 = vst.msk [vmem:[%s282 + $0x28] sm:$0xff] %vm1000, %v1076
        %1167 = vst.msk [vmem:[%s282 + $0x30] sm:$0xff] %vm1000, %v1078
        %1168 = vst.msk [vmem:[%s282 + $0x38] sm:$0xff] %vm1000, %v1080
        %1169 = vst.msk [vmem:[%s282 + $0x40] sm:$0xff] %vm1000, %v1082
        %1170 = vst.msk [vmem:[%s282 + $0x48] sm:$0xff] %vm1000, %v1084
        %1171 = vst.msk [vmem:[%s282 + $0x50] sm:$0xff] %vm1000, %v1086
        %1172 = vst.msk [vmem:[%s282 + $0x58] sm:$0xff] %vm1000, %v1088
        %1173 = vst.msk [vmem:[%s282 + $0x60] sm:$0xff] %vm1000, %v1090
        %1174 = vst.msk [vmem:[%s282 + $0x68] sm:$0xff] %vm1000, %v1092
        %1175 = vst.msk [vmem:[%s282 + $0x70] sm:$0xff] %vm1000, %v1094
        %1176 = vst.msk [vmem:[%s282 + $0x78] sm:$0xff] %vm1000, %v1096
        %1177 = vst.msk [vmem:[%s282 + $0x80] sm:$0xff] %vm1000, %v1098
        %1178 = vst.msk [vmem:[%s282 + $0x88] sm:$0xff] %vm1000, %v1100
        %1179 = vst.msk [vmem:[%s282 + $0x90] sm:$0xff] %vm1000, %v1102
        %1180 = vst.msk [vmem:[%s282 + $0x98] sm:$0xff] %vm1000, %v1104
        %1181 = vst.msk [vmem:[%s282 + $0xa0] sm:$0xff] %vm1000, %v1106
        %1182 = vst.msk [vmem:[%s282 + $0xa8] sm:$0xff] %vm1000, %v1108
        %1183 = vst.msk [vmem:[%s282 + $0xb0] sm:$0xff] %vm1000, %v1110
        %1184 = vst.msk [vmem:[%s282 + $0xb8] sm:$0xff] %vm1000, %v1112
        %1185 = vst.msk [vmem:[%s282 + $0xc0] sm:$0xff] %vm1000, %v1114
        %1186 = vst.msk [vmem:[%s282 + $0xc8] sm:$0xff] %vm1000, %v1116
        %1187 = vst.msk [vmem:[%s282 + $0xd0] sm:$0xff] %vm1000, %v1118
        %1188 = vst.msk [vmem:[%s282 + $0xd8] sm:$0xff] %vm1000, %v1120
        %1189 = vst.msk [vmem:[%s282 + $0xe0] sm:$0xff] %vm1000, %v1122
        %1190 = vst.msk [vmem:[%s282 + $0xe8] sm:$0xff] %vm1000, %v1124
        %1191 = vst.msk [vmem:[%s282 + $0xf0] sm:$0xff] %vm1000, %v1126
        %1192 = vst.msk [vmem:[%s282 + $0xf8] sm:$0xff] %vm1000, %v1128
        %1193 = vst.msk [vmem:[%s292] sm:$0xff] %vm1000, %v812
        %1194 = vst.msk [vmem:[%s292 + $0x8] sm:$0xff] %vm1000, %v818
        %1195 = vst.msk [vmem:[%s292 + $0x10] sm:$0xff] %vm1000, %v824
        %1196 = vst.msk [vmem:[%s292 + $0x18] sm:$0xff] %vm1000, %v830
        %1197 = vst.msk [vmem:[%s292 + $0x20] sm:$0xff] %vm1000, %v836
        %1198 = vst.msk [vmem:[%s292 + $0x28] sm:$0xff] %vm1000, %v842
        %1199 = vst.msk [vmem:[%s292 + $0x30] sm:$0xff] %vm1000, %v848
        %1200 = vst.msk [vmem:[%s292 + $0x38] sm:$0xff] %vm1000, %v854
        %1201 = vst.msk [vmem:[%s292 + $0x40] sm:$0xff] %vm1000, %v860
        %1202 = vst.msk [vmem:[%s292 + $0x48] sm:$0xff] %vm1000, %v866
        %1203 = vst.msk [vmem:[%s292 + $0x50] sm:$0xff] %vm1000, %v872
        %1204 = vst.msk [vmem:[%s292 + $0x58] sm:$0xff] %vm1000, %v878
        %1205 = vst.msk [vmem:[%s292 + $0x60] sm:$0xff] %vm1000, %v884
        %1206 = vst.msk [vmem:[%s292 + $0x68] sm:$0xff] %vm1000, %v890
        %1207 = vst.msk [vmem:[%s292 + $0x70] sm:$0xff] %vm1000, %v896
        %1208 = vst.msk [vmem:[%s292 + $0x78] sm:$0xff] %vm1000, %v902
        %1209 = vst.msk [vmem:[%s292 + $0x80] sm:$0xff] %vm1000, %v908
        %1210 = vst.msk [vmem:[%s292 + $0x88] sm:$0xff] %vm1000, %v914
        %1211 = vst.msk [vmem:[%s292 + $0x90] sm:$0xff] %vm1000, %v920
        %1212 = vst.msk [vmem:[%s292 + $0x98] sm:$0xff] %vm1000, %v926
        %1213 = vst.msk [vmem:[%s292 + $0xa0] sm:$0xff] %vm1000, %v932
        %1214 = vst.msk [vmem:[%s292 + $0xa8] sm:$0xff] %vm1000, %v938
        %1215 = vst.msk [vmem:[%s292 + $0xb0] sm:$0xff] %vm1000, %v944
        %1216 = vst.msk [vmem:[%s292 + $0xb8] sm:$0xff] %vm1000, %v950
        %1217 = vst.msk [vmem:[%s292 + $0xc0] sm:$0xff] %vm1000, %v956
        %1218 = vst.msk [vmem:[%s292 + $0xc8] sm:$0xff] %vm1000, %v962
        %1219 = vst.msk [vmem:[%s292 + $0xd0] sm:$0xff] %vm1000, %v968
        %1220 = vst.msk [vmem:[%s292 + $0xd8] sm:$0xff] %vm1000, %v974
        %1221 = vst.msk [vmem:[%s292 + $0xe0] sm:$0xff] %vm1000, %v980
        %1222 = vst.msk [vmem:[%s292 + $0xe8] sm:$0xff] %vm1000, %v986
        %1223 = vst.msk [vmem:[%s292 + $0xf0] sm:$0xff] %vm1000, %v992
        %1224 = vst.msk [vmem:[%s292 + $0xf8] sm:$0xff] %vm1000, %v998
        %s1225 = smul.u32 32, %s24
        %p1226 = scmp.lt.s32.totalorder %s23, 1
        %s1227 = scalar_select %p1226, %s23, 1
        %p1228 = scmp.lt.s32.totalorder %s1225, 31
        %s1229 = scalar_select %p1228, %s1225, 31
        %s1230 = smul.addr %s1227, 32
        %s1231 = sadd.s32 %s1229, %s1230
        %s1232 = smul.addr %s1231, 8
        %s1233 = scalar_lea.vmem %s2, %s1232
        %s1234 = smul.u32 32, %s24
        %p1235 = scmp.lt.s32.totalorder %s23, 1
        %s1236 = scalar_select %p1235, %s23, 1
        %p1237 = scmp.lt.s32.totalorder %s1234, 31
        %s1238 = scalar_select %p1237, %s1234, 31
        %s1239 = smul.addr %s1236, 32
        %s1240 = sadd.s32 %s1238, %s1239
        %s1241 = smul.addr %s1240, 8
        %s1242 = scalar_lea.vmem %s3, %s1241
        %s1243 = smul.u32 32, %s24
        %p1244 = scmp.lt.s32.totalorder %s23, 1
        %s1245 = scalar_select %p1244, %s23, 1
        %p1246 = scmp.lt.s32.totalorder %s1243, 31
        %s1247 = scalar_select %p1246, %s1243, 31
        %s1248 = smul.addr %s1245, 32
        %s1249 = sadd.s32 %s1247, %s1248
        %s1250 = smul.addr %s1249, 8
        %s1251 = scalar_lea.vmem %s4, %s1250
        // Predicated region
        $region33: #{tpu_custom_call.1} parent=27 // pred_check
          %p1252 = pneg %p100
        $region34: #{tpu_custom_call.1} parent=27 // pred_check_branch
          %1254 = sbr.rel (%p1252) target = $region36
        $region35: #{tpu_custom_call.1} parent=27 // pred_region
          %s1255 = smul.u32 32, %s24
        $region36: #{tpu_custom_call.1} parent=27 // pred_fallthru
          _
        // Predicated region
        $region37: #{tpu_custom_call.1} parent=27 // pred_check
          %p1256 = pneg %p128
        $region38: #{tpu_custom_call.1} parent=27 // pred_check_branch
          %1258 = sbr.rel (%p1256) target = $region40
        $region39: #{tpu_custom_call.1} parent=27 // pred_region
          %s1259 = smul.u32 32, %s24
        $region40: #{tpu_custom_call.1} parent=27 // pred_fallthru
          _
        // Predicated region
        $region41: #{tpu_custom_call.1} parent=27 // pred_check
          %p1260 = pneg %p156
        $region42: #{tpu_custom_call.1} parent=27 // pred_check_branch
          %1262 = sbr.rel (%p1260) target = $region44
        $region43: #{tpu_custom_call.1} parent=27 // pred_region
          %s1263 = smul.u32 32, %s24
        $region44: #{tpu_custom_call.1} parent=27 // pred_fallthru
          _
      $region28: #{tpu_custom_call.1} parent=5 // pred_fallthru
        _
      %p1264 = scmp.le.s32.totalorder 2, %s14
      // Predicated region
      $region45: #{tpu_custom_call.1} parent=5 // pred_check
        %p1265 = pneg %p1264
      $region46: #{tpu_custom_call.1} parent=5 // pred_check_branch
        %1267 = sbr.rel (%p1265) target = $region48
      $region47: #{tpu_custom_call.1} parent=5 // pred_region
        %s1268 = ssub.s32 %s14, 2
        // Predicated region
        $region49: #{tpu_custom_call.1} parent=47 // pred_check
          %p1269 = pneg %p106
        $region50: #{tpu_custom_call.1} parent=47 // pred_check_branch
          %1271 = sbr.rel (%p1269) target = $region52
        $region51: #{tpu_custom_call.1} parent=47 // pred_region
          %s1272 = smul.u32 32, %s26
          %p1273 = scmp.lt.s32.totalorder %s25, 1
          %s1274 = scalar_select %p1273, %s25, 1
          %p1275 = scmp.lt.s32.totalorder %s1272, 31
          %s1276 = scalar_select %p1275, %s1272, 31
          %s1277 = smul.addr %s1274, 32
          %s1278 = sadd.s32 %s1276, %s1277
          %s1279 = smul.addr %s1278, 8
          %s1280 = scalar_lea.vmem %s2, %s1279
        $region52: #{tpu_custom_call.1} parent=47 // pred_fallthru
          _
        // Predicated region
        $region53: #{tpu_custom_call.1} parent=47 // pred_check
          %p1281 = pneg %p134
        $region54: #{tpu_custom_call.1} parent=47 // pred_check_branch
          %1283 = sbr.rel (%p1281) target = $region56
        $region55: #{tpu_custom_call.1} parent=47 // pred_region
          %s1284 = smul.u32 32, %s26
          %p1285 = scmp.lt.s32.totalorder %s25, 1
          %s1286 = scalar_select %p1285, %s25, 1
          %p1287 = scmp.lt.s32.totalorder %s1284, 31
          %s1288 = scalar_select %p1287, %s1284, 31
          %s1289 = smul.addr %s1286, 32
          %s1290 = sadd.s32 %s1288, %s1289
          %s1291 = smul.addr %s1290, 8
          %s1292 = scalar_lea.vmem %s3, %s1291
        $region56: #{tpu_custom_call.1} parent=47 // pred_fallthru
          _
        // Predicated region
        $region57: #{tpu_custom_call.1} parent=47 // pred_check
          %p1293 = pneg %p162
        $region58: #{tpu_custom_call.1} parent=47 // pred_check_branch
          %1295 = sbr.rel (%p1293) target = $region60
        $region59: #{tpu_custom_call.1} parent=47 // pred_region
          %s1296 = smul.u32 32, %s26
          %p1297 = scmp.lt.s32.totalorder %s25, 1
          %s1298 = scalar_select %p1297, %s25, 1
          %p1299 = scmp.lt.s32.totalorder %s1296, 31
          %s1300 = scalar_select %p1299, %s1296, 31
          %s1301 = smul.addr %s1298, 32
          %s1302 = sadd.s32 %s1300, %s1301
          %s1303 = smul.addr %s1302, 8
          %s1304 = scalar_lea.vmem %s4, %s1303
        $region60: #{tpu_custom_call.1} parent=47 // pred_fallthru
          _
      $region48: #{tpu_custom_call.1} parent=5 // pred_fallthru
        _
    $region6: #{tpu_custom_call.1} parent=1 // loop_footer
      %s18 = sadd.s32 1, %s14
    $region7: #{tpu_custom_call.1} parent=1 // loop_footer_branch
      %13 = sbr.rel target = $region3
    $region8: #{tpu_custom_call.1} parent=1 // loop_exit
      _
    %1305 = vsyncpa [#allocation3], 1
    %s1306 = scalar_lea.sflag [#allocation3], 1
    %1307 = vsyncpa %s1306, 1

</llo_original>
